<compile_context>
chip_gen: v5e
topology: v5e:2x2
jax: 0.10.0
libtpu: 0.0.40
codegen_flags: <defaults>
</compile_context>

<pallas_src>
import math

import jax
import jax.numpy as jnp
from jax.experimental import pallas as pl
from jax.experimental.pallas import tpu as pltpu

BN_EPS = 0.001
_HAS_BUFFERED = hasattr(pl, "Buffered")


def _round_up(x, m):
    return (x + m - 1) // m * m


def _pad2d(a, rows, cols):
    out = jnp.zeros((rows, cols), a.dtype)
    return out.at[:a.shape[0], :a.shape[1]].set(a)


def _vmem_capacity_bytes():
    try:
        return int(pltpu.get_tpu_info().vmem_capacity_bytes)
    except Exception:
        return 64 << 20  # conservative default (v7x per-TC VMEM)


def _resident_spec(shape, single_buffer):
    """Whole-array, grid-invariant (resident) block; optionally single-buffered."""
    if single_buffer and _HAS_BUFFERED:
        return pl.BlockSpec(shape, lambda i: (0, 0), pipeline_mode=pl.Buffered(1))
    return pl.BlockSpec(shape, lambda i: (0, 0))


def _build_mlp_kernel(n_layers, has_cov, inject, douts):
    """Fused multi-layer kernel: (Linear + folded-BN + ReLU) x n_layers.

    Ref layout: x_ref, [cov_ref], (wx_0, [wc_0]), ..., bias_ref, o_ref
    """
    def kernel(*refs):
        pos = 0
        x_ref = refs[pos]; pos += 1
        cov_v = None
        if has_cov:
            cov_v = refs[pos][...]                     # (TB, pcov) bf16, loaded once
            pos += 1
        w_refs = []
        for l in range(n_layers):
            w_refs.append(refs[pos]); pos += 1
            if has_cov and inject[l]:
                w_refs.append(refs[pos]); pos += 1
        b_ref = refs[pos]; pos += 1
        o_ref = refs[pos]

        h = x_ref[...]                                 # (TB, pin) bf16
        wi = 0
        for l in range(n_layers):
            # Linear (BN already folded into W'/b'): MXU dot, f32 accumulation.
            acc = jnp.dot(h, w_refs[wi][...],
                          preferred_element_type=jnp.float32)
            wi += 1
            if has_cov and inject[l]:
                # Covariate injection as a second dot (no concat materialized).
                acc = acc + jnp.dot(cov_v, w_refs[wi][...],
                                    preferred_element_type=jnp.float32)
                wi += 1
            acc = acc + b_ref[l:l + 1, :douts[l]]      # folded bias, (1, dout_l) f32
            acc = jnp.maximum(acc, 0.0)                # ReLU; Dropout(eval)=identity
            if l + 1 < n_layers:
                h = acc.astype(jnp.bfloat16)           # stays on-chip
            else:
                o_ref[...] = acc.astype(o_ref.dtype)   # exact (TB, n_out) store
    return kernel


class LayersPallas:
    """JAX/Pallas port of scvi `Layers` (forward pass, eval mode)."""

    def __init__(self, n_in, n_out, n_cov=None, n_layers=1, n_hidden=128,
                 inject_covariates=True, seed=0, batch_tile=512):
        self.n_in, self.n_out = n_in, n_out
        self.n_cov = 0 if n_cov is None else n_cov
        self.n_layers = n_layers
        self.inject_covariates = inject_covariates
        self.batch_tile = batch_tile
        self.layers_dim = [n_in] + (n_layers - 1) * [n_hidden] + [n_out]

        key = jax.random.PRNGKey(seed)
        self.params = []
        for i, (d_in, d_out) in enumerate(zip(self.layers_dim[:-1], self.layers_dim[1:])):
            d_in_eff = d_in + self.n_cov * int(self._inject(i))
            key, kw, kb, kg, kbe, km, kv = jax.random.split(key, 7)
            bound = 1.0 / math.sqrt(float(d_in_eff))
            w = jax.random.uniform(kw, (d_in_eff, d_out), jnp.float32, -bound, bound)
            b = jax.random.uniform(kb, (d_out,), jnp.float32, -bound, bound)
            gamma = 1.0 + 0.1 * jax.random.normal(kg, (d_out,), jnp.float32)
            beta = 0.1 * jax.random.normal(kbe, (d_out,), jnp.float32)
            rmean = 0.1 * jax.random.normal(km, (d_out,), jnp.float32)
            rvar = 1.0 + 0.1 * jax.random.uniform(kv, (d_out,), jnp.float32)
            self.params.append(dict(w=w, b=b, gamma=gamma, beta=beta,
                                    mean=rmean, var=rvar))
        self._fold_and_pad()

    def _inject(self, layer_num):
        return layer_num == 0 or (layer_num > 0 and self.inject_covariates)

    def _fold_and_pad(self):
        """Fold BN(eval) into W/b, split off the covariate block, cast to bf16.

        Only the contraction dims of the *streamed* operands (n_in of layer 0
        and n_cov) are padded to a multiple of 8 sublanes; no 128-lane padding.
        """
        dims = self.layers_dim
        self.pin = _round_up(dims[0], 8)
        self.pcov = _round_up(self.n_cov, 8) if self.n_cov > 0 else 0
        self.inject = [self._inject(i) for i in range(self.n_layers)]
        self.max_dout = max(dims[1:])

        w_list = []
        bias = jnp.zeros((self.n_layers, self.max_dout), jnp.float32)
        for l, p in enumerate(self.params):
            d_in, d_out = dims[l], dims[l + 1]
            scale = p["gamma"] * jax.lax.rsqrt(p["var"] + BN_EPS)
            w_f = p["w"] * scale[None, :]                      # fold BN into weights
            b_f = (p["b"] - p["mean"]) * scale + p["beta"]     # fold BN into bias
            wx = w_f[:d_in]
            k_rows = self.pin if l == 0 else d_in
            w_list.append(_pad2d(wx, k_rows, d_out).astype(jnp.bfloat16))
            if self.n_cov > 0 and self.inject[l]:
                wc = w_f[d_in:]
                w_list.append(_pad2d(wc, self.pcov, d_out).astype(jnp.bfloat16))
            bias = bias.at[l, :d_out].set(b_f)
        self._w_list = w_list
        self._bias = bias
        self._kernel = _build_mlp_kernel(self.n_layers, self.n_cov > 0,
                                         tuple(self.inject), tuple(dims[1:]))

    def _select_batch_tile(self, B):
        B8 = _round_up(max(int(B), 1), 8)
        if B8 <= 256:
            return B8                                  # small batch: one step
        tb = max(128, min(_round_up(self.batch_tile, 128), 512))
        # keep >= 2 grid steps so ("parallel",) can feed both v7x TensorCores
        tb = min(tb, max(128, _round_up((B8 + 1) // 2, 128)))
        return tb

    def __call__(self, x, cov=None):
        if self.n_cov > 0 and cov is None:
            raise ValueError("cov is required when n_cov > 0")
        B = x.shape[0]
        TB = self._select_batch_tile(B)
        Bpad = _round_up(B, TB)
        grid = (Bpad // TB,)
        pin, pcov, n_out = self.pin, self.pcov, self.n_out

        # Cast to bf16 BEFORE padding (no full-size f32 intermediate); pad rows
        # to the tile and the feature dim only up to a multiple of 8.
        x_bf = jnp.pad(x.astype(jnp.bfloat16),
                       ((0, Bpad - B), (0, pin - x.shape[1])))
        inputs = [x_bf]
        if self.n_cov > 0:
            cov_bf = jnp.pad(cov.astype(jnp.bfloat16),
                             ((0, Bpad - B), (0, pcov - cov.shape[1])))
            inputs.append(cov_bf)
        inputs.extend(self._w_list)
        inputs.append(self._bias)

        # Advisory cost estimate (helps XLA schedule around the kernel).
        flops = 0
        for l in range(self.n_layers):
            k = pin if l == 0 else self.layers_dim[l]
            flops += 2 * Bpad * k * self.layers_dim[l + 1]
            if self.n_cov > 0 and self.inject[l]:
                flops += 2 * Bpad * pcov * self.layers_dim[l + 1]
        bytes_accessed = int(sum(int(a.size) * a.dtype.itemsize for a in inputs)
                             + Bpad * n_out * 4)

        # Chip-aware VMEM cap: ~85% of physical per-core VMEM
        # (~108 MiB on v5e/v6e, ~54 MiB on v7x).
        vmem_limit = max(int(_vmem_capacity_bytes() * 0.85), 32 << 20)

        def attempt(single_buffer):
            in_specs = [pl.BlockSpec((TB, pin), lambda i: (i, 0))]
            if self.n_cov > 0:
                in_specs.append(pl.BlockSpec((TB, pcov), lambda i: (i, 0)))
            for w in self._w_list:
                in_specs.append(_resident_spec(w.shape, single_buffer))
            in_specs.append(_resident_spec(self._bias.shape, single_buffer))
            return pl.pallas_call(
                self._kernel,
                out_shape=jax.ShapeDtypeStruct((Bpad, n_out), jnp.float32),
                grid=grid,
                in_specs=in_specs,
                out_specs=pl.BlockSpec((TB, n_out), lambda i: (i, 0)),
                compiler_params=pltpu.CompilerParams(
                    dimension_semantics=("parallel",),
                    vmem_limit_bytes=vmem_limit),
                cost_estimate=pl.CostEstimate(flops=flops, transcendentals=0,
                                              bytes_accessed=bytes_accessed),
            )(*inputs)

        try:
            out = jax.block_until_ready(attempt(single_buffer=True))
        except Exception:
            # Fallback: default double-buffered resident weights (always valid;
            # only costs 2x resident-weight VMEM).
            out = jax.block_until_ready(attempt(single_buffer=False))
        return out[:B]


def _reference_f32(model, x, cov):
    """Pure-JAX f32 reference with un-folded BatchNorm (original module math)."""
    h = x
    for i, p in enumerate(model.params):
        if model.n_cov > 0 and model._inject(i):
            h = jnp.concatenate([h, cov], axis=-1)
        h = h @ p["w"] + p["b"]
        h = (h - p["mean"]) / jnp.sqrt(p["var"] + BN_EPS) * p["gamma"] + p["beta"]
        h = jnp.maximum(h, 0.0)
    return h


def _reference_matched(model, x, cov):
    """Pure-JAX reference using the exact folded/bf16 math of the kernel."""
    xb = jnp.pad(x.astype(jnp.bfloat16), ((0, 0), (0, model.pin - x.shape[1])))
    cb = None
    if model.n_cov > 0:
        cb = jnp.pad(cov.astype(jnp.bfloat16),
                     ((0, 0), (0, model.pcov - cov.shape[1])))
    h = xb
    wi = 0
    acc = None
    for l in range(model.n_layers):
        acc = jnp.dot(h, model._w_list[wi], preferred_element_type=jnp.float32)
        wi += 1
        if model.n_cov > 0 and model.inject[l]:
            acc = acc + jnp.dot(cb, model._w_list[wi],
                                preferred_element_type=jnp.float32)
            wi += 1
        acc = acc + model._bias[l:l + 1, :model.layers_dim[l + 1]]
        acc = jnp.maximum(acc, 0.0)
        h = acc.astype(jnp.bfloat16)
    return acc


if __name__ == "__main__":
    # Small shapes consistent with the module: batch=512 (tiled by 256 -> grid of 2),
    # n_in=32, n_cov=4, n_layers=2, n_hidden=128 (module default), n_out=16.
    B, N_IN, N_COV, N_LAYERS, N_HIDDEN, N_OUT = 512, 32, 4, 2, 128, 16

    key = jax.random.PRNGKey(0)
    kx, kc = jax.random.split(key)
    x = jax.random.normal(kx, (B, N_IN), jnp.float32)
    cov = jax.random.normal(kc, (B, N_COV), jnp.float32)

    model = LayersPallas(n_in=N_IN, n_out=N_OUT, n_cov=N_COV,
                         n_layers=N_LAYERS, n_hidden=N_HIDDEN,
                         inject_covariates=True, seed=0, batch_tile=512)

    out = jax.block_until_ready(model(x, cov))
    assert out.shape == (B, N_OUT), out.shape

    # Strict check: identical folded/bf16 math in plain JAX.
    ref_m = _reference_matched(model, x, cov)
    err_m = float(jnp.max(jnp.abs(out - ref_m)))
    assert jnp.allclose(out, ref_m, atol=1e-3, rtol=1e-3), err_m

    # Sanity check against the original f32 BN math (looser tolerance because
    # MXU operands are bf16 for throughput, f32 accumulation).
    ref_f = _reference_f32(model, x, cov)
    err_f = float(jnp.max(jnp.abs(out - ref_f)))
    assert jnp.allclose(out, ref_f, atol=5e-2, rtol=5e-2), err_f

    print("KERNEL_OK")
</pallas_src>

<mosaic_0001>
module attributes {stable_mosaic.version = 11 : i64} {
  func.func @kernel(%arg0: i32, %arg1: memref<256x32xbf16, #tpu.memory_space<vmem>>, %arg2: memref<256x8xbf16, #tpu.memory_space<vmem>>, %arg3: memref<32x128xbf16, #tpu.memory_space<vmem>>, %arg4: memref<8x128xbf16, #tpu.memory_space<vmem>>, %arg5: memref<128x16xbf16, #tpu.memory_space<vmem>>, %arg6: memref<8x16xbf16, #tpu.memory_space<vmem>>, %arg7: memref<2x128xf32, #tpu.memory_space<vmem>>, %arg8: memref<256x16xf32, #tpu.memory_space<vmem>>) attributes {dimension_semantics = [#tpu.dimension_semantics<parallel>], iteration_bounds = array<i64: 2>, scalar_prefetch = 0 : i64, scratch_operands = 0 : i64, tpu.core_type = #tpu.core_type<tc>, window_params = [{transform_indices = @transform_0, window_bounds = array<i64: 256, 32>}, {transform_indices = @transform_1, window_bounds = array<i64: 256, 8>}, {pipeline_mode = #tpu.pipeline_mode<synchronous>, transform_indices = @transform_2, window_bounds = array<i64: 32, 128>}, {pipeline_mode = #tpu.pipeline_mode<synchronous>, transform_indices = @transform_3, window_bounds = array<i64: 8, 128>}, {pipeline_mode = #tpu.pipeline_mode<synchronous>, transform_indices = @transform_4, window_bounds = array<i64: 128, 16>}, {pipeline_mode = #tpu.pipeline_mode<synchronous>, transform_indices = @transform_5, window_bounds = array<i64: 8, 16>}, {pipeline_mode = #tpu.pipeline_mode<synchronous>, transform_indices = @transform_6, window_bounds = array<i64: 2, 128>}, {transform_indices = @transform_7, window_bounds = array<i64: 256, 16>}]} {
    %c0 = arith.constant 0 : index
    %c0_0 = arith.constant 0 : index
    %0 = vector.load %arg2[%c0, %c0_0] : memref<256x8xbf16, #tpu.memory_space<vmem>>, vector<256x8xbf16>
    %c0_1 = arith.constant 0 : index
    %c0_2 = arith.constant 0 : index
    %1 = vector.load %arg1[%c0_1, %c0_2] : memref<256x32xbf16, #tpu.memory_space<vmem>>, vector<256x32xbf16>
    %c0_3 = arith.constant 0 : index
    %c0_4 = arith.constant 0 : index
    %2 = vector.load %arg3[%c0_3, %c0_4] : memref<32x128xbf16, #tpu.memory_space<vmem>>, vector<32x128xbf16>
    %cst = arith.constant dense<0.000000e+00> : vector<256x128xf32>
    %3 = tpu.matmul %1, %2, %cst {dimension_numbers = #tpu.dot_dimension_numbers<[1], [0], [0], [1], [0, 0, 1, 1], [], []>} : vector<256x32xbf16>, vector<32x128xbf16>, vector<256x128xf32> -> vector<256x128xf32>
    %c0_5 = arith.constant 0 : index
    %c0_6 = arith.constant 0 : index
    %4 = vector.load %arg4[%c0_5, %c0_6] : memref<8x128xbf16, #tpu.memory_space<vmem>>, vector<8x128xbf16>
    %cst_7 = arith.constant dense<0.000000e+00> : vector<256x128xf32>
    %5 = tpu.matmul %0, %4, %cst_7 {dimension_numbers = #tpu.dot_dimension_numbers<[1], [0], [0], [1], [0, 0, 1, 1], [], []>} : vector<256x8xbf16>, vector<8x128xbf16>, vector<256x128xf32> -> vector<256x128xf32>
    %6 = arith.addf %3, %5 : vector<256x128xf32>
    %c0_8 = arith.constant 0 : index
    %c0_9 = arith.constant 0 : index
    %7 = vector.load %arg7[%c0_8, %c0_9] : memref<2x128xf32, #tpu.memory_space<vmem>>, vector<1x128xf32>
    %8 = vector.broadcast %7 : vector<1x128xf32> to vector<256x128xf32>
    %9 = arith.addf %6, %8 : vector<256x128xf32>
    %cst_10 = arith.constant 0.000000e+00 : f32
    %10 = vector.broadcast %cst_10 : f32 to vector<256x128xf32>
    %11 = arith.maximumf %9, %10 : vector<256x128xf32>
    %12 = arith.truncf %11 : vector<256x128xf32> to vector<256x128xbf16>
    %c0_11 = arith.constant 0 : index
    %c0_12 = arith.constant 0 : index
    %13 = vector.load %arg5[%c0_11, %c0_12] : memref<128x16xbf16, #tpu.memory_space<vmem>>, vector<128x16xbf16>
    %cst_13 = arith.constant dense<0.000000e+00> : vector<256x16xf32>
    %14 = tpu.matmul %12, %13, %cst_13 {dimension_numbers = #tpu.dot_dimension_numbers<[1], [0], [0], [1], [0, 0, 1, 1], [], []>} : vector<256x128xbf16>, vector<128x16xbf16>, vector<256x16xf32> -> vector<256x16xf32>
    %c0_14 = arith.constant 0 : index
    %c0_15 = arith.constant 0 : index
    %15 = vector.load %arg6[%c0_14, %c0_15] : memref<8x16xbf16, #tpu.memory_space<vmem>>, vector<8x16xbf16>
    %cst_16 = arith.constant dense<0.000000e+00> : vector<256x16xf32>
    %16 = tpu.matmul %0, %15, %cst_16 {dimension_numbers = #tpu.dot_dimension_numbers<[1], [0], [0], [1], [0, 0, 1, 1], [], []>} : vector<256x8xbf16>, vector<8x16xbf16>, vector<256x16xf32> -> vector<256x16xf32>
    %17 = arith.addf %14, %16 : vector<256x16xf32>
    %c1 = arith.constant 1 : index
    %c0_17 = arith.constant 0 : index
    %18 = vector.load %arg7[%c1, %c0_17] : memref<2x128xf32, #tpu.memory_space<vmem>>, vector<1x16xf32>
    %19 = vector.broadcast %18 : vector<1x16xf32> to vector<256x16xf32>
    %20 = arith.addf %17, %19 : vector<256x16xf32>
    %cst_18 = arith.constant 0.000000e+00 : f32
    %21 = vector.broadcast %cst_18 : f32 to vector<256x16xf32>
    %22 = arith.maximumf %20, %21 : vector<256x16xf32>
    %c0_19 = arith.constant 0 : index
    %c0_20 = arith.constant 0 : index
    %23 = vector.load %arg8[%c0_19, %c0_20] : memref<256x16xf32, #tpu.memory_space<vmem>>, vector<256x16xf32>
    tpu.vector_store %arg8[%c0_19, %c0_20], %22 {strides = array<i32>} : memref<256x16xf32, #tpu.memory_space<vmem>>, vector<256x16xf32>,
    return
  }
  func.func @transform_0(%arg0: i32) -> (i32, i32) {
    %c0_i32 = arith.constant 0 : i32
    %c0_i32_0 = arith.constant 0 : i32
    return %arg0, %c0_i32 : i32, i32
  }
  func.func @transform_1(%arg0: i32) -> (i32, i32) {
    %c0_i32 = arith.constant 0 : i32
    %c0_i32_0 = arith.constant 0 : i32
    return %arg0, %c0_i32 : i32, i32
  }
  func.func @transform_2(%arg0: i32) -> (i32, i32) {
    %c0_i32 = arith.constant 0 : i32
    %c0_i32_0 = arith.constant 0 : i32
    %c0_i32_1 = arith.constant 0 : i32
    return %c0_i32, %c0_i32_0 : i32, i32
  }
  func.func @transform_3(%arg0: i32) -> (i32, i32) {
    %c0_i32 = arith.constant 0 : i32
    %c0_i32_0 = arith.constant 0 : i32
    %c0_i32_1 = arith.constant 0 : i32
    return %c0_i32, %c0_i32_0 : i32, i32
  }
  func.func @transform_4(%arg0: i32) -> (i32, i32) {
    %c0_i32 = arith.constant 0 : i32
    %c0_i32_0 = arith.constant 0 : i32
    %c0_i32_1 = arith.constant 0 : i32
    return %c0_i32, %c0_i32_0 : i32, i32
  }
  func.func @transform_5(%arg0: i32) -> (i32, i32) {
    %c0_i32 = arith.constant 0 : i32
    %c0_i32_0 = arith.constant 0 : i32
    %c0_i32_1 = arith.constant 0 : i32
    return %c0_i32, %c0_i32_0 : i32, i32
  }
  func.func @transform_6(%arg0: i32) -> (i32, i32) {
    %c0_i32 = arith.constant 0 : i32
    %c0_i32_0 = arith.constant 0 : i32
    %c0_i32_1 = arith.constant 0 : i32
    return %c0_i32, %c0_i32_0 : i32, i32
  }
  func.func @transform_7(%arg0: i32) -> (i32, i32) {
    %c0_i32 = arith.constant 0 : i32
    %c0_i32_0 = arith.constant 0 : i32
    return %arg0, %c0_i32 : i32, i32
  }
}

module attributes {stable_mosaic.version = 11 : i64} {
  func.func @kernel(%arg0: i32, %arg1: memref<256x32xbf16, #tpu.memory_space<vmem>>, %arg2: memref<256x8xbf16, #tpu.memory_space<vmem>>, %arg3: memref<32x128xbf16, #tpu.memory_space<vmem>>, %arg4: memref<8x128xbf16, #tpu.memory_space<vmem>>, %arg5: memref<128x16xbf16, #tpu.memory_space<vmem>>, %arg6: memref<8x16xbf16, #tpu.memory_space<vmem>>, %arg7: memref<2x128xf32, #tpu.memory_space<vmem>>, %arg8: memref<256x16xf32, #tpu.memory_space<vmem>>) attributes {dimension_semantics = [#tpu.dimension_semantics<parallel>], iteration_bounds = array<i64: 2>, scalar_prefetch = 0 : i64, scratch_operands = 0 : i64, tpu.core_type = #tpu.core_type<tc>, window_params = [{transform_indices = @transform_0, window_bounds = array<i64: 256, 32>}, {transform_indices = @transform_1, window_bounds = array<i64: 256, 8>}, {pipeline_mode = #tpu.pipeline_mode<synchronous>, transform_indices = @transform_2, window_bounds = array<i64: 32, 128>}, {pipeline_mode = #tpu.pipeline_mode<synchronous>, transform_indices = @transform_3, window_bounds = array<i64: 8, 128>}, {pipeline_mode = #tpu.pipeline_mode<synchronous>, transform_indices = @transform_4, window_bounds = array<i64: 128, 16>}, {pipeline_mode = #tpu.pipeline_mode<synchronous>, transform_indices = @transform_5, window_bounds = array<i64: 8, 16>}, {pipeline_mode = #tpu.pipeline_mode<synchronous>, transform_indices = @transform_6, window_bounds = array<i64: 2, 128>}, {transform_indices = @transform_7, window_bounds = array<i64: 256, 16>}]} {
    %c0 = arith.constant 0 : index
    %c0_0 = arith.constant 0 : index
    %0 = vector.load %arg2[%c0, %c0_0] : memref<256x8xbf16, #tpu.memory_space<vmem>>, vector<256x8xbf16>
    %c0_1 = arith.constant 0 : index
    %c0_2 = arith.constant 0 : index
    %1 = vector.load %arg1[%c0_1, %c0_2] : memref<256x32xbf16, #tpu.memory_space<vmem>>, vector<256x32xbf16>
    %c0_3 = arith.constant 0 : index
    %c0_4 = arith.constant 0 : index
    %2 = vector.load %arg3[%c0_3, %c0_4] : memref<32x128xbf16, #tpu.memory_space<vmem>>, vector<32x128xbf16>
    %cst = arith.constant dense<0.000000e+00> : vector<256x128xf32>
    %3 = tpu.matmul %1, %2, %cst {dimension_numbers = #tpu.dot_dimension_numbers<[1], [0], [0], [1], [0, 0, 1, 1], [], []>} : vector<256x32xbf16>, vector<32x128xbf16>, vector<256x128xf32> -> vector<256x128xf32>
    %c0_5 = arith.constant 0 : index
    %c0_6 = arith.constant 0 : index
    %4 = vector.load %arg4[%c0_5, %c0_6] : memref<8x128xbf16, #tpu.memory_space<vmem>>, vector<8x128xbf16>
    %cst_7 = arith.constant dense<0.000000e+00> : vector<256x128xf32>
    %5 = tpu.matmul %0, %4, %cst_7 {dimension_numbers = #tpu.dot_dimension_numbers<[1], [0], [0], [1], [0, 0, 1, 1], [], []>} : vector<256x8xbf16>, vector<8x128xbf16>, vector<256x128xf32> -> vector<256x128xf32>
    %6 = arith.addf %3, %5 : vector<256x128xf32>
    %c0_8 = arith.constant 0 : index
    %c0_9 = arith.constant 0 : index
    %7 = vector.load %arg7[%c0_8, %c0_9] : memref<2x128xf32, #tpu.memory_space<vmem>>, vector<1x128xf32>
    %8 = vector.broadcast %7 : vector<1x128xf32> to vector<256x128xf32>
    %9 = arith.addf %6, %8 : vector<256x128xf32>
    %cst_10 = arith.constant 0.000000e+00 : f32
    %10 = vector.broadcast %cst_10 : f32 to vector<256x128xf32>
    %11 = arith.maximumf %9, %10 : vector<256x128xf32>
    %12 = arith.truncf %11 : vector<256x128xf32> to vector<256x128xbf16>
    %c0_11 = arith.constant 0 : index
    %c0_12 = arith.constant 0 : index
    %13 = vector.load %arg5[%c0_11, %c0_12] : memref<128x16xbf16, #tpu.memory_space<vmem>>, vector<128x16xbf16>
    %cst_13 = arith.constant dense<0.000000e+00> : vector<256x16xf32>
    %14 = tpu.matmul %12, %13, %cst_13 {dimension_numbers = #tpu.dot_dimension_numbers<[1], [0], [0], [1], [0, 0, 1, 1], [], []>} : vector<256x128xbf16>, vector<128x16xbf16>, vector<256x16xf32> -> vector<256x16xf32>
    %c0_14 = arith.constant 0 : index
    %c0_15 = arith.constant 0 : index
    %15 = vector.load %arg6[%c0_14, %c0_15] : memref<8x16xbf16, #tpu.memory_space<vmem>>, vector<8x16xbf16>
    %cst_16 = arith.constant dense<0.000000e+00> : vector<256x16xf32>
    %16 = tpu.matmul %0, %15, %cst_16 {dimension_numbers = #tpu.dot_dimension_numbers<[1], [0], [0], [1], [0, 0, 1, 1], [], []>} : vector<256x8xbf16>, vector<8x16xbf16>, vector<256x16xf32> -> vector<256x16xf32>
    %17 = arith.addf %14, %16 : vector<256x16xf32>
    %c1 = arith.constant 1 : index
    %c0_17 = arith.constant 0 : index
    %18 = vector.load %arg7[%c1, %c0_17] : memref<2x128xf32, #tpu.memory_space<vmem>>, vector<1x16xf32>
    %19 = vector.broadcast %18 : vector<1x16xf32> to vector<256x16xf32>
    %20 = arith.addf %17, %19 : vector<256x16xf32>
    %cst_18 = arith.constant 0.000000e+00 : f32
    %21 = vector.broadcast %cst_18 : f32 to vector<256x16xf32>
    %22 = arith.maximumf %20, %21 : vector<256x16xf32>
    %c0_19 = arith.constant 0 : index
    %c0_20 = arith.constant 0 : index
    %23 = vector.load %arg8[%c0_19, %c0_20] : memref<256x16xf32, #tpu.memory_space<vmem>>, vector<256x16xf32>
    tpu.vector_store %arg8[%c0_19, %c0_20], %22 {strides = array<i32>} : memref<256x16xf32, #tpu.memory_space<vmem>>, vector<256x16xf32>,
    return
  }
  func.func @transform_0(%arg0: i32) -> (i32, i32) {
    %c0_i32 = arith.constant 0 : i32
    %c0_i32_0 = arith.constant 0 : i32
    return %arg0, %c0_i32 : i32, i32
  }
  func.func @transform_1(%arg0: i32) -> (i32, i32) {
    %c0_i32 = arith.constant 0 : i32
    %c0_i32_0 = arith.constant 0 : i32
    return %arg0, %c0_i32 : i32, i32
  }
  func.func @transform_2(%arg0: i32) -> (i32, i32) {
    %c0_i32 = arith.constant 0 : i32
    %c0_i32_0 = arith.constant 0 : i32
    %c0_i32_1 = arith.constant 0 : i32
    return %c0_i32, %c0_i32_0 : i32, i32
  }
  func.func @transform_3(%arg0: i32) -> (i32, i32) {
    %c0_i32 = arith.constant 0 : i32
    %c0_i32_0 = arith.constant 0 : i32
    %c0_i32_1 = arith.constant 0 : i32
    return %c0_i32, %c0_i32_0 : i32, i32
  }
  func.func @transform_4(%arg0: i32) -> (i32, i32) {
    %c0_i32 = arith.constant 0 : i32
    %c0_i32_0 = arith.constant 0 : i32
    %c0_i32_1 = arith.constant 0 : i32
    return %c0_i32, %c0_i32_0 : i32, i32
  }
  func.func @transform_5(%arg0: i32) -> (i32, i32) {
    %c0_i32 = arith.constant 0 : i32
    %c0_i32_0 = arith.constant 0 : i32
    %c0_i32_1 = arith.constant 0 : i32
    return %c0_i32, %c0_i32_0 : i32, i32
  }
  func.func @transform_6(%arg0: i32) -> (i32, i32) {
    %c0_i32 = arith.constant 0 : i32
    %c0_i32_0 = arith.constant 0 : i32
    %c0_i32_1 = arith.constant 0 : i32
    return %c0_i32, %c0_i32_0 : i32, i32
  }
  func.func @transform_7(%arg0: i32) -> (i32, i32) {
    %c0_i32 = arith.constant 0 : i32
    %c0_i32_0 = arith.constant 0 : i32
    return %arg0, %c0_i32 : i32, i32
  }
}

</mosaic_0001>

<llo_original>
// kernel: tpu_custom_call.1
$region0: #{tpu_custom_call.1}
  #allocation0 [shape = 'u32[]', space=smem, size = 0x4, offset = 0x4, fixed_abs, tag = 'smem constant byte address 0x4 - core index']
  #allocation1 [shape = 'u32[72,128]{1,0:T(1,128)}', space=vmem, size = 0x9000, scoped, tag = 'internal scratch']
  %s0 = inlined_call_operand.vmem [shape: bf16[512,32], index: 0, kind: input, shape index: {}]
  %s1 = inlined_call_operand.vmem [shape: bf16[512,8], index: 1, kind: input, shape index: {}]
  %s2 = inlined_call_operand.vmem [shape: bf16[32,128], index: 2, kind: input, shape index: {}]
  %s3 = inlined_call_operand.vmem [shape: bf16[8,128], index: 3, kind: input, shape index: {}]
  %s4 = inlined_call_operand.vmem [shape: bf16[128,16], index: 4, kind: input, shape index: {}]
  %s5 = inlined_call_operand.vmem [shape: bf16[8,16], index: 5, kind: input, shape index: {}]
  %s6 = inlined_call_operand.vmem [shape: f32[2,128], index: 6, kind: input, shape index: {}]
  %s7 = inlined_call_operand.vmem [shape: f32[512,16], index: 7, kind: output, shape index: {}]
  %s8 = sld [smem:[#allocation0]]
  $region61: #{tpu_custom_call.1} parent=0
    _
  %s10 = ssub.s32 1, %s8
  %s11 = scalar_select 0, %s10, %s8
  loop: start=0, step=1, limit=4
  $region2: #{tpu_custom_call.1} parent=0 // loop_pre_header
    _
  $region3: #{tpu_custom_call.1} parent=0 // loop_header
    %s13 = sphi 0, %s17
    %p14 = scmp.ge.s32.totalorder %s13, 4
    %s23 = sphi 0, %s25
    %s26 = sphi 0, %s23
    %s27 = sphi 0, %s26
    %s43 = sphi 0, %s27
    %s49 = sphi 0, %s51
    %s52 = sphi 0, %s49
    %s53 = sphi 0, %s52
    %s69 = sphi 0, %s53
    %s73 = sphi 0, %s73
    %s75 = sphi 0, %s73
    %s76 = sphi 0, %s75
    %s90 = sphi 0, %s76
    %s94 = sphi 0, %s94
    %s96 = sphi 0, %s94
    %s97 = sphi 0, %s96
    %s111 = sphi 0, %s97
    %s115 = sphi 0, %s115
    %s117 = sphi 0, %s115
    %s118 = sphi 0, %s117
    %s132 = sphi 0, %s118
    %s136 = sphi 0, %s136
    %s138 = sphi 0, %s136
    %s139 = sphi 0, %s138
    %s153 = sphi 0, %s139
    %s157 = sphi 0, %s157
    %s159 = sphi 0, %s157
    %s160 = sphi 0, %s159
    %s174 = sphi 0, %s160
    %s180 = sphi 0, %s182
    %s183 = sphi 0, %s180
    %s184 = sphi 0, %s183
    %s200 = sphi 0, %s184
  $region4: #{tpu_custom_call.1} parent=0 // loop_header_branch
    %16 = sbr.rel (%p14) target = $region8
  $region5: #{tpu_custom_call.1} parent=0 // loop_body
    %s18 = ssub.s32 %s13, 1
    %s19 = ssub.s32 %s13, 2
    %s20 = sadd.s32 %s13, 1
    %s21 = ssub.s32 %s13, %s20
    %p22 = scmp.eq.s32.totalorder %s21, 0
    %s24 = sadd.s32 %s23, 1
    %s25 = scalar_select %p22, %s23, %s24
    %p28 = pneg %p22
    %p29 = scmp.eq.s32.totalorder %s13, 1
    %p30 = por %p28, %p29
    %p31 = scmp.ne.s32.totalorder %s23, %s26
    %p32 = scmp.eq.s32.totalorder %s13, 0
    %p33 = por %p31, %p32
    %p34 = scmp.ne.s32.totalorder %s23, %s26
    %p35 = scmp.eq.s32.totalorder %s18, 1
    %p36 = por %p34, %p35
    %p37 = scmp.ne.s32.totalorder %s26, %s27
    %p38 = scmp.eq.s32.totalorder %s18, 0
    %p39 = por %p37, %p38
    %p40 = scmp.ne.s32.totalorder %s26, %s27
    %p41 = scmp.eq.s32.totalorder %s19, 1
    %p42 = por %p40, %p41
    %p44 = scmp.ne.s32.totalorder %s27, %s43
    %p45 = scmp.eq.s32.totalorder %s19, 0
    %p46 = por %p44, %p45
    %s47 = ssub.s32 %s13, %s20
    %p48 = scmp.eq.s32.totalorder %s47, 0
    %s50 = sadd.s32 %s49, 1
    %s51 = scalar_select %p48, %s49, %s50
    %p54 = pneg %p48
    %p55 = scmp.eq.s32.totalorder %s13, 1
    %p56 = por %p54, %p55
    %p57 = scmp.ne.s32.totalorder %s49, %s52
    %p58 = scmp.eq.s32.totalorder %s13, 0
    %p59 = por %p57, %p58
    %p60 = scmp.ne.s32.totalorder %s49, %s52
    %p61 = scmp.eq.s32.totalorder %s18, 1
    %p62 = por %p60, %p61
    %p63 = scmp.ne.s32.totalorder %s52, %s53
    %p64 = scmp.eq.s32.totalorder %s18, 0
    %p65 = por %p63, %p64
    %p66 = scmp.ne.s32.totalorder %s52, %s53
    %p67 = scmp.eq.s32.totalorder %s19, 1
    %p68 = por %p66, %p67
    %p70 = scmp.ne.s32.totalorder %s53, %s69
    %p71 = scmp.eq.s32.totalorder %s19, 0
    %p72 = por %p70, %p71
    %s74 = sadd.s32 %s73, 1
    %p77 = scmp.eq.s32.totalorder %s13, 1
    %p78 = scmp.ne.s32.totalorder %s73, %s75
    %p79 = scmp.eq.s32.totalorder %s13, 0
    %p80 = por %p78, %p79
    %p81 = scmp.ne.s32.totalorder %s73, %s75
    %p82 = scmp.eq.s32.totalorder %s18, 1
    %p83 = por %p81, %p82
    %p84 = scmp.ne.s32.totalorder %s75, %s76
    %p85 = scmp.eq.s32.totalorder %s18, 0
    %p86 = por %p84, %p85
    %p87 = scmp.ne.s32.totalorder %s75, %s76
    %p88 = scmp.eq.s32.totalorder %s19, 1
    %p89 = por %p87, %p88
    %p91 = scmp.ne.s32.totalorder %s76, %s90
    %p92 = scmp.eq.s32.totalorder %s19, 0
    %p93 = por %p91, %p92
    %s95 = sadd.s32 %s94, 1
    %p98 = scmp.eq.s32.totalorder %s13, 1
    %p99 = scmp.ne.s32.totalorder %s94, %s96
    %p100 = scmp.eq.s32.totalorder %s13, 0
    %p101 = por %p99, %p100
    %p102 = scmp.ne.s32.totalorder %s94, %s96
    %p103 = scmp.eq.s32.totalorder %s18, 1
    %p104 = por %p102, %p103
    %p105 = scmp.ne.s32.totalorder %s96, %s97
    %p106 = scmp.eq.s32.totalorder %s18, 0
    %p107 = por %p105, %p106
    %p108 = scmp.ne.s32.totalorder %s96, %s97
    %p109 = scmp.eq.s32.totalorder %s19, 1
    %p110 = por %p108, %p109
    %p112 = scmp.ne.s32.totalorder %s97, %s111
    %p113 = scmp.eq.s32.totalorder %s19, 0
    %p114 = por %p112, %p113
    %s116 = sadd.s32 %s115, 1
    %p119 = scmp.eq.s32.totalorder %s13, 1
    %p120 = scmp.ne.s32.totalorder %s115, %s117
    %p121 = scmp.eq.s32.totalorder %s13, 0
    %p122 = por %p120, %p121
    %p123 = scmp.ne.s32.totalorder %s115, %s117
    %p124 = scmp.eq.s32.totalorder %s18, 1
    %p125 = por %p123, %p124
    %p126 = scmp.ne.s32.totalorder %s117, %s118
    %p127 = scmp.eq.s32.totalorder %s18, 0
    %p128 = por %p126, %p127
    %p129 = scmp.ne.s32.totalorder %s117, %s118
    %p130 = scmp.eq.s32.totalorder %s19, 1
    %p131 = por %p129, %p130
    %p133 = scmp.ne.s32.totalorder %s118, %s132
    %p134 = scmp.eq.s32.totalorder %s19, 0
    %p135 = por %p133, %p134
    %s137 = sadd.s32 %s136, 1
    %p140 = scmp.eq.s32.totalorder %s13, 1
    %p141 = scmp.ne.s32.totalorder %s136, %s138
    %p142 = scmp.eq.s32.totalorder %s13, 0
    %p143 = por %p141, %p142
    %p144 = scmp.ne.s32.totalorder %s136, %s138
    %p145 = scmp.eq.s32.totalorder %s18, 1
    %p146 = por %p144, %p145
    %p147 = scmp.ne.s32.totalorder %s138, %s139
    %p148 = scmp.eq.s32.totalorder %s18, 0
    %p149 = por %p147, %p148
    %p150 = scmp.ne.s32.totalorder %s138, %s139
    %p151 = scmp.eq.s32.totalorder %s19, 1
    %p152 = por %p150, %p151
    %p154 = scmp.ne.s32.totalorder %s139, %s153
    %p155 = scmp.eq.s32.totalorder %s19, 0
    %p156 = por %p154, %p155
    %s158 = sadd.s32 %s157, 1
    %p161 = scmp.eq.s32.totalorder %s13, 1
    %p162 = scmp.ne.s32.totalorder %s157, %s159
    %p163 = scmp.eq.s32.totalorder %s13, 0
    %p164 = por %p162, %p163
    %p165 = scmp.ne.s32.totalorder %s157, %s159
    %p166 = scmp.eq.s32.totalorder %s18, 1
    %p167 = por %p165, %p166
    %p168 = scmp.ne.s32.totalorder %s159, %s160
    %p169 = scmp.eq.s32.totalorder %s18, 0
    %p170 = por %p168, %p169
    %p171 = scmp.ne.s32.totalorder %s159, %s160
    %p172 = scmp.eq.s32.totalorder %s19, 1
    %p173 = por %p171, %p172
    %p175 = scmp.ne.s32.totalorder %s160, %s174
    %p176 = scmp.eq.s32.totalorder %s19, 0
    %p177 = por %p175, %p176
    %s178 = ssub.s32 %s13, %s20
    %p179 = scmp.eq.s32.totalorder %s178, 0
    %s181 = sadd.s32 %s180, 1
    %s182 = scalar_select %p179, %s180, %s181
    %p185 = pneg %p179
    %p186 = scmp.eq.s32.totalorder %s13, 1
    %p187 = por %p185, %p186
    %p188 = scmp.ne.s32.totalorder %s180, %s183
    %p189 = scmp.eq.s32.totalorder %s13, 0
    %p190 = por %p188, %p189
    %p191 = scmp.ne.s32.totalorder %s180, %s183
    %p192 = scmp.eq.s32.totalorder %s18, 1
    %p193 = por %p191, %p192
    %p194 = scmp.ne.s32.totalorder %s183, %s184
    %p195 = scmp.eq.s32.totalorder %s18, 0
    %p196 = por %p194, %p195
    %p197 = scmp.ne.s32.totalorder %s183, %s184
    %p198 = scmp.eq.s32.totalorder %s19, 1
    %p199 = por %p197, %p198
    %p201 = scmp.ne.s32.totalorder %s184, %s200
    %p202 = scmp.eq.s32.totalorder %s19, 0
    %p203 = por %p201, %p202
    %p204 = scmp.le.s32.totalorder 1, %s13
    %p205 = scmp.lt.s32.totalorder %s13, 3
    %p206 = pnand %p204, %p205
    %p207 = pneg %p206
    // Predicated region
    $region9: #{tpu_custom_call.1} parent=5 // pred_check
      _
    $region10: #{tpu_custom_call.1} parent=5 // pred_check_branch
      %209 = sbr.rel (%p206) target = $region12
    $region11: #{tpu_custom_call.1} parent=5 // pred_region
      %s210 = ssub.s32 %s13, 1
      // Predicated region
      $region13: #{tpu_custom_call.1} parent=11 // pred_check
        %p211 = pneg %p86
      $region14: #{tpu_custom_call.1} parent=11 // pred_check_branch
        %213 = sbr.rel (%p211) target = $region16
      $region15: #{tpu_custom_call.1} parent=11 // pred_region
        _
      $region16: #{tpu_custom_call.1} parent=11 // pred_fallthru
        _
      // Predicated region
      $region17: #{tpu_custom_call.1} parent=11 // pred_check
        %p214 = pneg %p107
      $region18: #{tpu_custom_call.1} parent=11 // pred_check_branch
        %216 = sbr.rel (%p214) target = $region20
      $region19: #{tpu_custom_call.1} parent=11 // pred_region
        _
      $region20: #{tpu_custom_call.1} parent=11 // pred_fallthru
        _
      // Predicated region
      $region21: #{tpu_custom_call.1} parent=11 // pred_check
        %p217 = pneg %p128
      $region22: #{tpu_custom_call.1} parent=11 // pred_check_branch
        %219 = sbr.rel (%p217) target = $region24
      $region23: #{tpu_custom_call.1} parent=11 // pred_region
        _
      $region24: #{tpu_custom_call.1} parent=11 // pred_fallthru
        _
      // Predicated region
      $region25: #{tpu_custom_call.1} parent=11 // pred_check
        %p220 = pneg %p149
      $region26: #{tpu_custom_call.1} parent=11 // pred_check_branch
        %222 = sbr.rel (%p220) target = $region28
      $region27: #{tpu_custom_call.1} parent=11 // pred_region
        _
      $region28: #{tpu_custom_call.1} parent=11 // pred_fallthru
        _
      // Predicated region
      $region29: #{tpu_custom_call.1} parent=11 // pred_check
        %p223 = pneg %p170
      $region30: #{tpu_custom_call.1} parent=11 // pred_check_branch
        %225 = sbr.rel (%p223) target = $region32
      $region31: #{tpu_custom_call.1} parent=11 // pred_region
        _
      $region32: #{tpu_custom_call.1} parent=11 // pred_fallthru
        _
    $region12: #{tpu_custom_call.1} parent=5 // pred_fallthru
      _
    %p226 = scmp.lt.s32.totalorder %s13, 2
    // Predicated region
    $region33: #{tpu_custom_call.1} parent=5 // pred_check
      %p227 = pneg %p226
    $region34: #{tpu_custom_call.1} parent=5 // pred_check_branch
      %229 = sbr.rel (%p227) target = $region36
    $region35: #{tpu_custom_call.1} parent=5 // pred_region
      // Predicated region
      $region37: #{tpu_custom_call.1} parent=35 // pred_check
        %p230 = pneg %p33
      $region38: #{tpu_custom_call.1} parent=35 // pred_check_branch
        %232 = sbr.rel (%p230) target = $region40
      $region39: #{tpu_custom_call.1} parent=35 // pred_region
        %s233 = smul.u32 32, %s13
        %p234 = scmp.lt.s32.totalorder %s233, 63
        %s235 = scalar_select %p234, %s233, 63
        %s236 = smul.addr %s235, 4
        %s237 = scalar_lea.vmem %s0, %s236
        %s238 = smul.u32 32, %s13
      $region40: #{tpu_custom_call.1} parent=35 // pred_fallthru
        _
      // Predicated region
      $region41: #{tpu_custom_call.1} parent=35 // pred_check
        %p239 = pneg %p59
      $region42: #{tpu_custom_call.1} parent=35 // pred_check_branch
        %241 = sbr.rel (%p239) target = $region44
      $region43: #{tpu_custom_call.1} parent=35 // pred_region
        %s242 = smul.u32 32, %s13
        %p243 = scmp.lt.s32.totalorder %s242, 63
        %s244 = scalar_select %p243, %s242, 63
        %s245 = smul.addr %s244, 4
        %s246 = scalar_lea.vmem %s1, %s245
        %s247 = smul.u32 32, %s13
      $region44: #{tpu_custom_call.1} parent=35 // pred_fallthru
        _
    $region36: #{tpu_custom_call.1} parent=5 // pred_fallthru
      _
    %p248 = scmp.le.s32.totalorder 1, %s13
    %p249 = scmp.lt.s32.totalorder %s13, 3
    %p250 = pnand %p248, %p249
    %p251 = pneg %p250
    // Predicated region
    $region45: #{tpu_custom_call.1} parent=5 // pred_check
      _
    $region46: #{tpu_custom_call.1} parent=5 // pred_check_branch
      %253 = sbr.rel (%p250) target = $region48
    $region47: #{tpu_custom_call.1} parent=5 // pred_region
      %s254 = ssub.s32 %s13, 1
      %s255 = smul.u32 32, %s18
      %p256 = scmp.lt.s32.totalorder %s255, 63
      %s257 = scalar_select %p256, %s255, 63
      %s258 = smul.addr %s257, 4
      %s259 = scalar_lea.vmem %s0, %s258
      %p260 = pneg %p39
      %p261 = pneg %p36
      %s262 = smul.u32 32, %s18
      %p263 = scmp.lt.s32.totalorder %s262, 63
      %s264 = scalar_select %p263, %s262, 63
      %s265 = smul.addr %s264, 4
      %s266 = scalar_lea.vmem %s1, %s265
      %p267 = pneg %p65
      %p268 = pneg %p62
      %p269 = pneg %p86
      %p270 = pneg %p83
      %p271 = pneg %p107
      %p272 = pneg %p104
      %p273 = pneg %p128
      %p274 = pneg %p125
      %p275 = pneg %p149
      %p276 = pneg %p146
      %p277 = pneg %p170
      %p278 = pneg %p167
      %p279 = pneg %p196
      %p280 = pneg %p193
      %s281 = smul.u32 32, %s18
      %p282 = scmp.lt.s32.totalorder %s281, 63
      %s283 = scalar_select %p282, %s281, 63
      %s284 = smul.addr %s283, 8
      %s285 = scalar_lea.vmem %s7, %s284
      %s286 = smul.u32 32, %s18
      %p287 = scmp.lt.s32.totalorder %s286, 63
      %s288 = scalar_select %p287, %s286, 63
      %s289 = smul.addr %s288, 4
      %s290 = scalar_lea.vmem %s0, %s289
      %s291 = smul.u32 32, %s18
      %s292 = smul.u32 32, %s18
      %p293 = scmp.lt.s32.totalorder %s292, 63
      %s294 = scalar_select %p293, %s292, 63
      %s295 = smul.addr %s294, 4
      %s296 = scalar_lea.vmem %s1, %s295
      %s297 = smul.u32 32, %s18
      %s298 = smul.u32 32, %s18
      %p299 = scmp.lt.s32.totalorder %s298, 63
      %s300 = scalar_select %p299, %s298, 63
      %s301 = smul.addr %s300, 8
      %s302 = scalar_lea.vmem %s7, %s301
      %s303 = smul.u32 32, %s18
      %v305 = vld [vmem:[%s296] sm:$0xf]
      %v306 = vld [vmem:[%s296 + $0x4] sm:$0xf]
      %v307 = vld [vmem:[%s296 + $0x8] sm:$0xf]
      %v308 = vld [vmem:[%s296 + $0xc] sm:$0xf]
      %v309 = vld [vmem:[%s296 + $0x10] sm:$0xf]
      %v310 = vld [vmem:[%s296 + $0x14] sm:$0xf]
      %v311 = vld [vmem:[%s296 + $0x18] sm:$0xf]
      %v312 = vld [vmem:[%s296 + $0x1c] sm:$0xf]
      %v313 = vld [vmem:[%s296 + $0x20] sm:$0xf]
      %v314 = vld [vmem:[%s296 + $0x24] sm:$0xf]
      %v315 = vld [vmem:[%s296 + $0x28] sm:$0xf]
      %v316 = vld [vmem:[%s296 + $0x2c] sm:$0xf]
      %v317 = vld [vmem:[%s296 + $0x30] sm:$0xf]
      %v318 = vld [vmem:[%s296 + $0x34] sm:$0xf]
      %v319 = vld [vmem:[%s296 + $0x38] sm:$0xf]
      %v320 = vld [vmem:[%s296 + $0x3c] sm:$0xf]
      %v321 = vld [vmem:[%s296 + $0x40] sm:$0xf]
      %v322 = vld [vmem:[%s296 + $0x44] sm:$0xf]
      %v323 = vld [vmem:[%s296 + $0x48] sm:$0xf]
      %v324 = vld [vmem:[%s296 + $0x4c] sm:$0xf]
      %v325 = vld [vmem:[%s296 + $0x50] sm:$0xf]
      %v326 = vld [vmem:[%s296 + $0x54] sm:$0xf]
      %v327 = vld [vmem:[%s296 + $0x58] sm:$0xf]
      %v328 = vld [vmem:[%s296 + $0x5c] sm:$0xf]
      %v329 = vld [vmem:[%s296 + $0x60] sm:$0xf]
      %v330 = vld [vmem:[%s296 + $0x64] sm:$0xf]
      %v331 = vld [vmem:[%s296 + $0x68] sm:$0xf]
      %v332 = vld [vmem:[%s296 + $0x6c] sm:$0xf]
      %v333 = vld [vmem:[%s296 + $0x70] sm:$0xf]
      %v334 = vld [vmem:[%s296 + $0x74] sm:$0xf]
      %v335 = vld [vmem:[%s296 + $0x78] sm:$0xf]
      %v336 = vld [vmem:[%s296 + $0x7c] sm:$0xf]
      %v337 = vld [vmem:[%s290] sm:$0xf]
      %v338 = vld [vmem:[%s290 + $0x4] sm:$0xf]
      %v339 = vld [vmem:[%s290 + $0x8] sm:$0xf]
      %v340 = vld [vmem:[%s290 + $0xc] sm:$0xf]
      %v341 = vld [vmem:[%s290 + $0x10] sm:$0xf]
      %v342 = vld [vmem:[%s290 + $0x14] sm:$0xf]
      %v343 = vld [vmem:[%s290 + $0x18] sm:$0xf]
      %v344 = vld [vmem:[%s290 + $0x1c] sm:$0xf]
      %v345 = vld [vmem:[%s290 + $0x20] sm:$0xf]
      %v346 = vld [vmem:[%s290 + $0x24] sm:$0xf]
      %v347 = vld [vmem:[%s290 + $0x28] sm:$0xf]
      %v348 = vld [vmem:[%s290 + $0x2c] sm:$0xf]
      %v349 = vld [vmem:[%s290 + $0x30] sm:$0xf]
      %v350 = vld [vmem:[%s290 + $0x34] sm:$0xf]
      %v351 = vld [vmem:[%s290 + $0x38] sm:$0xf]
      %v352 = vld [vmem:[%s290 + $0x3c] sm:$0xf]
      %v353 = vld [vmem:[%s290 + $0x40] sm:$0xf]
      %v354 = vld [vmem:[%s290 + $0x44] sm:$0xf]
      %v355 = vld [vmem:[%s290 + $0x48] sm:$0xf]
      %v356 = vld [vmem:[%s290 + $0x4c] sm:$0xf]
      %v357 = vld [vmem:[%s290 + $0x50] sm:$0xf]
      %v358 = vld [vmem:[%s290 + $0x54] sm:$0xf]
      %v359 = vld [vmem:[%s290 + $0x58] sm:$0xf]
      %v360 = vld [vmem:[%s290 + $0x5c] sm:$0xf]
      %v361 = vld [vmem:[%s290 + $0x60] sm:$0xf]
      %v362 = vld [vmem:[%s290 + $0x64] sm:$0xf]
      %v363 = vld [vmem:[%s290 + $0x68] sm:$0xf]
      %v364 = vld [vmem:[%s290 + $0x6c] sm:$0xf]
      %v365 = vld [vmem:[%s290 + $0x70] sm:$0xf]
      %v366 = vld [vmem:[%s290 + $0x74] sm:$0xf]
      %v367 = vld [vmem:[%s290 + $0x78] sm:$0xf]
      %v368 = vld [vmem:[%s290 + $0x7c] sm:$0xf]
      %v369 = vld [vmem:[%s2] sm:$0xf]
      %v370 = vld [vmem:[%s2 + $0x4] sm:$0xf]
      %v371 = vld [vmem:[%s2 + $0x8] sm:$0xf]
      %v372 = vld [vmem:[%s2 + $0xc] sm:$0xf]
      %v373 = vld [vmem:[%s3] sm:$0xf]
      %v406 = vunpack.c.l.b16 %v305
      %v407 = vunpack.c.l.b16 %v306
      %v408 = vunpack.c.l.b16 %v307
      %v409 = vunpack.c.l.b16 %v308
      %v410 = vunpack.c.l.b16 %v309
      %v411 = vunpack.c.l.b16 %v310
      %v412 = vunpack.c.l.b16 %v311
      %v413 = vunpack.c.l.b16 %v312
      %v414 = vunpack.c.l.b16 %v313
      %v415 = vunpack.c.l.b16 %v314
      %v416 = vunpack.c.l.b16 %v315
      %v417 = vunpack.c.l.b16 %v316
      %v418 = vunpack.c.l.b16 %v317
      %v419 = vunpack.c.l.b16 %v318
      %v420 = vunpack.c.l.b16 %v319
      %v421 = vunpack.c.l.b16 %v320
      %v422 = vunpack.c.l.b16 %v321
      %v423 = vunpack.c.l.b16 %v322
      %v424 = vunpack.c.l.b16 %v323
      %v425 = vunpack.c.l.b16 %v324
      %v426 = vunpack.c.l.b16 %v325
      %v427 = vunpack.c.l.b16 %v326
      %v428 = vunpack.c.l.b16 %v327
      %v429 = vunpack.c.l.b16 %v328
      %v430 = vunpack.c.l.b16 %v329
      %v431 = vunpack.c.l.b16 %v330
      %v432 = vunpack.c.l.b16 %v331
      %v433 = vunpack.c.l.b16 %v332
      %v434 = vunpack.c.l.b16 %v333
      %v435 = vunpack.c.l.b16 %v334
      %v436 = vunpack.c.l.b16 %v335
      %v437 = vunpack.c.l.b16 %v336
      %v438 = vpack.c.b16 %v407, %v406
      %v439 = vpack.c.b16 %v409, %v408
      %v440 = vpack.c.b16 %v411, %v410
      %v441 = vpack.c.b16 %v413, %v412
      %v442 = vpack.c.b16 %v415, %v414
      %v443 = vpack.c.b16 %v417, %v416
      %v444 = vpack.c.b16 %v419, %v418
      %v445 = vpack.c.b16 %v421, %v420
      %v446 = vpack.c.b16 %v423, %v422
      %v447 = vpack.c.b16 %v425, %v424
      %v448 = vpack.c.b16 %v427, %v426
      %v449 = vpack.c.b16 %v429, %v428
      %v450 = vpack.c.b16 %v431, %v430
      %v451 = vpack.c.b16 %v433, %v432
      %v452 = vpack.c.b16 %v435, %v434
      %v453 = vpack.c.b16 %v437, %v436
      %vm454 = vcmask 64512
      %v456 = vsel %vm454, %v438, 0
      %v459 = vsel %vm454, %v439, 0
      %v462 = vsel %vm454, %v440, 0
      %v465 = vsel %vm454, %v441, 0
      %v468 = vsel %vm454, %v442, 0
      %v471 = vsel %vm454, %v443, 0
      %v474 = vsel %vm454, %v444, 0
      %v477 = vsel %vm454, %v445, 0
      %v480 = vsel %vm454, %v446, 0
      %v483 = vsel %vm454, %v447, 0
      %v486 = vsel %vm454, %v448, 0
      %v489 = vsel %vm454, %v449, 0
      %v492 = vsel %vm454, %v450, 0
      %v495 = vsel %vm454, %v451, 0
      %v498 = vsel %vm454, %v452, 0
      %v501 = vsel %vm454, %v453, 0
      %vm503 = vcmask 1043456
      %v505 = vsel %vm503, %v373, 0
      %507 = vmatpush.bf16.msra.mxu0 0
      %508 = vmatpush.bf16.msra.mxu0 0
      %509 = vmatpush.bf16.msra.mxu0 0
      %510 = vmatpush.bf16.msra.mxu0 0
      %511 = vmatpush.bf16.msra.mxu0 0
      %512 = vmatpush.bf16.msra.mxu0 0
      %513 = vmatpush.bf16.msra.mxu0 0
      %514 = vmatpush.bf16.msra.mxu0 %v505
      %515 = vmatmul.bf16.gmra.mxu0 %v456
      %v516 = vpop.f32.mrf.mxu0
      %v517 = vadd.f32 0.0, %v516
      %v518 = vpop.f32.mrf.mxu0
      %v519 = vadd.f32 0.0, %v518
      %520 = vmatmul.bf16.gmra.mxu0 %v459
      %v521 = vpop.f32.mrf.mxu0
      %v522 = vadd.f32 0.0, %v521
      %v523 = vpop.f32.mrf.mxu0
      %v524 = vadd.f32 0.0, %v523
      %525 = vmatmul.bf16.gmra.mxu0 %v462
      %v526 = vpop.f32.mrf.mxu0
      %v527 = vadd.f32 0.0, %v526
      %v528 = vpop.f32.mrf.mxu0
      %v529 = vadd.f32 0.0, %v528
      %530 = vmatmul.bf16.gmra.mxu0 %v465
      %v531 = vpop.f32.mrf.mxu0
      %v532 = vadd.f32 0.0, %v531
      %v533 = vpop.f32.mrf.mxu0
      %v534 = vadd.f32 0.0, %v533
      %535 = vmatmul.bf16.gmra.mxu0 %v468
      %v536 = vpop.f32.mrf.mxu0
      %v537 = vadd.f32 0.0, %v536
      %v538 = vpop.f32.mrf.mxu0
      %v539 = vadd.f32 0.0, %v538
      %540 = vmatmul.bf16.gmra.mxu0 %v471
      %v541 = vpop.f32.mrf.mxu0
      %v542 = vadd.f32 0.0, %v541
      %v543 = vpop.f32.mrf.mxu0
      %v544 = vadd.f32 0.0, %v543
      %545 = vmatmul.bf16.gmra.mxu0 %v474
      %v546 = vpop.f32.mrf.mxu0
      %v547 = vadd.f32 0.0, %v546
      %v548 = vpop.f32.mrf.mxu0
      %v549 = vadd.f32 0.0, %v548
      %550 = vmatmul.bf16.gmra.mxu0 %v477
      %v551 = vpop.f32.mrf.mxu0
      %v552 = vadd.f32 0.0, %v551
      %v553 = vpop.f32.mrf.mxu0
      %v554 = vadd.f32 0.0, %v553
      %555 = vmatmul.bf16.gmra.mxu0 %v480
      %v556 = vpop.f32.mrf.mxu0
      %v557 = vadd.f32 0.0, %v556
      %v558 = vpop.f32.mrf.mxu0
      %v559 = vadd.f32 0.0, %v558
      %560 = vmatmul.bf16.gmra.mxu0 %v483
      %v561 = vpop.f32.mrf.mxu0
      %v562 = vadd.f32 0.0, %v561
      %v563 = vpop.f32.mrf.mxu0
      %v564 = vadd.f32 0.0, %v563
      %565 = vmatmul.bf16.gmra.mxu0 %v486
      %v566 = vpop.f32.mrf.mxu0
      %v567 = vadd.f32 0.0, %v566
      %v568 = vpop.f32.mrf.mxu0
      %v569 = vadd.f32 0.0, %v568
      %570 = vmatmul.bf16.gmra.mxu0 %v489
      %v571 = vpop.f32.mrf.mxu0
      %v572 = vadd.f32 0.0, %v571
      %v573 = vpop.f32.mrf.mxu0
      %v574 = vadd.f32 0.0, %v573
      %575 = vmatmul.bf16.gmra.mxu0 %v492
      %v576 = vpop.f32.mrf.mxu0
      %v577 = vadd.f32 0.0, %v576
      %v578 = vpop.f32.mrf.mxu0
      %v579 = vadd.f32 0.0, %v578
      %580 = vmatmul.bf16.gmra.mxu0 %v495
      %v581 = vpop.f32.mrf.mxu0
      %v582 = vadd.f32 0.0, %v581
      %v583 = vpop.f32.mrf.mxu0
      %v584 = vadd.f32 0.0, %v583
      %585 = vmatmul.bf16.gmra.mxu0 %v498
      %v586 = vpop.f32.mrf.mxu0
      %v587 = vadd.f32 0.0, %v586
      %v588 = vpop.f32.mrf.mxu0
      %v589 = vadd.f32 0.0, %v588
      %590 = vmatmul.bf16.gmra.mxu0 %v501
      %v591 = vpop.f32.mrf.mxu0
      %v592 = vadd.f32 0.0, %v591
      %v593 = vpop.f32.mrf.mxu0
      %v594 = vadd.f32 0.0, %v593
      %595 = vdwg.mxu0
      %v628 = vunpack.c.l.b16 %v337
      %v629 = vunpack.c.l.b16 %v338
      %v630 = vunpack.c.l.b16 %v339
      %v631 = vunpack.c.l.b16 %v340
      %v632 = vunpack.c.l.b16 %v341
      %v633 = vunpack.c.l.b16 %v342
      %v634 = vunpack.c.l.b16 %v343
      %v635 = vunpack.c.l.b16 %v344
      %v636 = vunpack.c.l.b16 %v345
      %v637 = vunpack.c.l.b16 %v346
      %v638 = vunpack.c.l.b16 %v347
      %v639 = vunpack.c.l.b16 %v348
      %v640 = vunpack.c.l.b16 %v349
      %v641 = vunpack.c.l.b16 %v350
      %v642 = vunpack.c.l.b16 %v351
      %v643 = vunpack.c.l.b16 %v352
      %v644 = vunpack.c.l.b16 %v353
      %v645 = vunpack.c.l.b16 %v354
      %v646 = vunpack.c.l.b16 %v355
      %v647 = vunpack.c.l.b16 %v356
      %v648 = vunpack.c.l.b16 %v357
      %v649 = vunpack.c.l.b16 %v358
      %v650 = vunpack.c.l.b16 %v359
      %v651 = vunpack.c.l.b16 %v360
      %v652 = vunpack.c.l.b16 %v361
      %v653 = vunpack.c.l.b16 %v362
      %v654 = vunpack.c.l.b16 %v363
      %v655 = vunpack.c.l.b16 %v364
      %v656 = vunpack.c.l.b16 %v365
      %v657 = vunpack.c.l.b16 %v366
      %v658 = vunpack.c.l.b16 %v367
      %v659 = vunpack.c.l.b16 %v368
      %v660 = vpack.c.b16 %v629, %v628
      %v661 = vpack.c.b16 %v631, %v630
      %v662 = vpack.c.b16 %v633, %v632
      %v663 = vpack.c.b16 %v635, %v634
      %v664 = vpack.c.b16 %v637, %v636
      %v665 = vpack.c.b16 %v639, %v638
      %v666 = vpack.c.b16 %v641, %v640
      %v667 = vpack.c.b16 %v643, %v642
      %v668 = vpack.c.b16 %v645, %v644
      %v669 = vpack.c.b16 %v647, %v646
      %v670 = vpack.c.b16 %v649, %v648
      %v671 = vpack.c.b16 %v651, %v650
      %v672 = vpack.c.b16 %v653, %v652
      %v673 = vpack.c.b16 %v655, %v654
      %v674 = vpack.c.b16 %v657, %v656
      %v675 = vpack.c.b16 %v659, %v658
      %v680 = vunpack.c.l.b16 %v369
      %v681 = vunpack.c.l.b16 %v370
      %v682 = vunpack.c.l.b16 %v371
      %v683 = vunpack.c.l.b16 %v372
      %v684 = vpack.c.b16 %v681, %v680
      %v685 = vpack.c.b16 %v683, %v682
      %vm688 = vcmask 261120
      %v690 = vsel %vm688, %v660, 0
      %v693 = vsel %vm688, %v661, 0
      %v696 = vsel %vm688, %v662, 0
      %v699 = vsel %vm688, %v663, 0
      %v702 = vsel %vm688, %v664, 0
      %v705 = vsel %vm688, %v665, 0
      %v708 = vsel %vm688, %v666, 0
      %v711 = vsel %vm688, %v667, 0
      %v714 = vsel %vm688, %v668, 0
      %v717 = vsel %vm688, %v669, 0
      %v720 = vsel %vm688, %v670, 0
      %v723 = vsel %vm688, %v671, 0
      %v726 = vsel %vm688, %v672, 0
      %v729 = vsel %vm688, %v673, 0
      %v732 = vsel %vm688, %v674, 0
      %v735 = vsel %vm688, %v675, 0
      %737 = vmatpush.bf16.msra.mxu0 0
      %738 = vmatpush.bf16.msra.mxu0 0
      %739 = vmatpush.bf16.msra.mxu0 0
      %740 = vmatpush.bf16.msra.mxu0 0
      %741 = vmatpush.bf16.msra.mxu0 0
      %742 = vmatpush.bf16.msra.mxu0 0
      %743 = vmatpush.bf16.msra.mxu0 %v685
      %744 = vmatpush.bf16.msra.mxu0 %v684
      %745 = vmatmul.bf16.gmra.mxu0 %v690
      %v746 = vpop.f32.mrf.mxu0
      %v747 = vadd.f32 %v517, %v746
      %v748 = vpop.f32.mrf.mxu0
      %v749 = vadd.f32 %v519, %v748
      %750 = vmatmul.bf16.gmra.mxu0 %v693
      %v751 = vpop.f32.mrf.mxu0
      %v752 = vadd.f32 %v522, %v751
      %v753 = vpop.f32.mrf.mxu0
      %v754 = vadd.f32 %v524, %v753
      %755 = vmatmul.bf16.gmra.mxu0 %v696
      %v756 = vpop.f32.mrf.mxu0
      %v757 = vadd.f32 %v527, %v756
      %v758 = vpop.f32.mrf.mxu0
      %v759 = vadd.f32 %v529, %v758
      %760 = vmatmul.bf16.gmra.mxu0 %v699
      %v761 = vpop.f32.mrf.mxu0
      %v762 = vadd.f32 %v532, %v761
      %v763 = vpop.f32.mrf.mxu0
      %v764 = vadd.f32 %v534, %v763
      %765 = vmatmul.bf16.gmra.mxu0 %v702
      %v766 = vpop.f32.mrf.mxu0
      %v767 = vadd.f32 %v537, %v766
      %v768 = vpop.f32.mrf.mxu0
      %v769 = vadd.f32 %v539, %v768
      %770 = vmatmul.bf16.gmra.mxu0 %v705
      %v771 = vpop.f32.mrf.mxu0
      %v772 = vadd.f32 %v542, %v771
      %v773 = vpop.f32.mrf.mxu0
      %v774 = vadd.f32 %v544, %v773
      %775 = vmatmul.bf16.gmra.mxu0 %v708
      %v776 = vpop.f32.mrf.mxu0
      %v777 = vadd.f32 %v547, %v776
      %v778 = vpop.f32.mrf.mxu0
      %v779 = vadd.f32 %v549, %v778
      %780 = vmatmul.bf16.gmra.mxu0 %v711
      %v781 = vpop.f32.mrf.mxu0
      %v782 = vadd.f32 %v552, %v781
      %v783 = vpop.f32.mrf.mxu0
      %v784 = vadd.f32 %v554, %v783
      %785 = vmatmul.bf16.gmra.mxu0 %v714
      %v786 = vpop.f32.mrf.mxu0
      %v787 = vadd.f32 %v557, %v786
      %v788 = vpop.f32.mrf.mxu0
      %v789 = vadd.f32 %v559, %v788
      %790 = vmatmul.bf16.gmra.mxu0 %v717
      %v791 = vpop.f32.mrf.mxu0
      %v792 = vadd.f32 %v562, %v791
      %v793 = vpop.f32.mrf.mxu0
      %v794 = vadd.f32 %v564, %v793
      %795 = vmatmul.bf16.gmra.mxu0 %v720
      %v796 = vpop.f32.mrf.mxu0
      %v797 = vadd.f32 %v567, %v796
      %v798 = vpop.f32.mrf.mxu0
      %v799 = vadd.f32 %v569, %v798
      %800 = vmatmul.bf16.gmra.mxu0 %v723
      %v801 = vpop.f32.mrf.mxu0
      %v802 = vadd.f32 %v572, %v801
      %v803 = vpop.f32.mrf.mxu0
      %v804 = vadd.f32 %v574, %v803
      %805 = vmatmul.bf16.gmra.mxu0 %v726
      %v806 = vpop.f32.mrf.mxu0
      %v807 = vadd.f32 %v577, %v806
      %v808 = vpop.f32.mrf.mxu0
      %v809 = vadd.f32 %v579, %v808
      %810 = vmatmul.bf16.gmra.mxu0 %v729
      %v811 = vpop.f32.mrf.mxu0
      %v812 = vadd.f32 %v582, %v811
      %v813 = vpop.f32.mrf.mxu0
      %v814 = vadd.f32 %v584, %v813
      %815 = vmatmul.bf16.gmra.mxu0 %v732
      %v816 = vpop.f32.mrf.mxu0
      %v817 = vadd.f32 %v587, %v816
      %v818 = vpop.f32.mrf.mxu0
      %v819 = vadd.f32 %v589, %v818
      %820 = vmatmul.bf16.gmra.mxu0 %v735
      %v821 = vpop.f32.mrf.mxu0
      %v822 = vadd.f32 %v592, %v821
      %v823 = vpop.f32.mrf.mxu0
      %v824 = vadd.f32 %v594, %v823
      %825 = vdwg.mxu0
      %v826 = vld [vmem:[%s6] sm:$0x1]
      %v827 = vperm.slane %v826, 0
      %v828 = vadd.f32 %v747, %v827
      %v829 = vadd.f32 %v749, %v827
      %v830 = vadd.f32 %v752, %v827
      %v831 = vadd.f32 %v754, %v827
      %v832 = vadd.f32 %v757, %v827
      %v833 = vadd.f32 %v759, %v827
      %v834 = vadd.f32 %v762, %v827
      %v835 = vadd.f32 %v764, %v827
      %v836 = vadd.f32 %v767, %v827
      %v837 = vadd.f32 %v769, %v827
      %v838 = vadd.f32 %v772, %v827
      %v839 = vadd.f32 %v774, %v827
      %v840 = vadd.f32 %v777, %v827
      %v841 = vadd.f32 %v779, %v827
      %v842 = vadd.f32 %v782, %v827
      %v843 = vadd.f32 %v784, %v827
      %v844 = vadd.f32 %v787, %v827
      %v845 = vadd.f32 %v789, %v827
      %v846 = vadd.f32 %v792, %v827
      %v847 = vadd.f32 %v794, %v827
      %v848 = vadd.f32 %v797, %v827
      %v849 = vadd.f32 %v799, %v827
      %v850 = vadd.f32 %v802, %v827
      %v851 = vadd.f32 %v804, %v827
      %v852 = vadd.f32 %v807, %v827
      %v853 = vadd.f32 %v809, %v827
      %v854 = vadd.f32 %v812, %v827
      %v855 = vadd.f32 %v814, %v827
      %v856 = vadd.f32 %v817, %v827
      %v857 = vadd.f32 %v819, %v827
      %v858 = vadd.f32 %v822, %v827
      %v859 = vadd.f32 %v824, %v827
      %v860 = vmax.f32 %v828, 0.0
      %v861 = vmax.f32 %v829, 0.0
      %v862 = vmax.f32 %v830, 0.0
      %v863 = vmax.f32 %v831, 0.0
      %v864 = vmax.f32 %v832, 0.0
      %v865 = vmax.f32 %v833, 0.0
      %v866 = vmax.f32 %v834, 0.0
      %v867 = vmax.f32 %v835, 0.0
      %v868 = vmax.f32 %v836, 0.0
      %v869 = vmax.f32 %v837, 0.0
      %v870 = vmax.f32 %v838, 0.0
      %v871 = vmax.f32 %v839, 0.0
      %v872 = vmax.f32 %v840, 0.0
      %v873 = vmax.f32 %v841, 0.0
      %v874 = vmax.f32 %v842, 0.0
      %v875 = vmax.f32 %v843, 0.0
      %v876 = vmax.f32 %v844, 0.0
      %v877 = vmax.f32 %v845, 0.0
      %v878 = vmax.f32 %v846, 0.0
      %v879 = vmax.f32 %v847, 0.0
      %v880 = vmax.f32 %v848, 0.0
      %v881 = vmax.f32 %v849, 0.0
      %v882 = vmax.f32 %v850, 0.0
      %v883 = vmax.f32 %v851, 0.0
      %v884 = vmax.f32 %v852, 0.0
      %v885 = vmax.f32 %v853, 0.0
      %v886 = vmax.f32 %v854, 0.0
      %v887 = vmax.f32 %v855, 0.0
      %v888 = vmax.f32 %v856, 0.0
      %v889 = vmax.f32 %v857, 0.0
      %v890 = vmax.f32 %v858, 0.0
      %v891 = vmax.f32 %v859, 0.0
      %v892 = vpack.c.bf16 %v861, %v860
      %v893 = vpack.c.bf16 %v863, %v862
      %v894 = vpack.c.bf16 %v865, %v864
      %v895 = vpack.c.bf16 %v867, %v866
      %v896 = vpack.c.bf16 %v869, %v868
      %v897 = vpack.c.bf16 %v871, %v870
      %v898 = vpack.c.bf16 %v873, %v872
      %v899 = vpack.c.bf16 %v875, %v874
      %v900 = vpack.c.bf16 %v877, %v876
      %v901 = vpack.c.bf16 %v879, %v878
      %v902 = vpack.c.bf16 %v881, %v880
      %v903 = vpack.c.bf16 %v883, %v882
      %v904 = vpack.c.bf16 %v885, %v884
      %v905 = vpack.c.bf16 %v887, %v886
      %v906 = vpack.c.bf16 %v889, %v888
      %v907 = vpack.c.bf16 %v891, %v890
      %v908 = vld [vmem:[%s4] sm:$0xf]
      %v909 = vld [vmem:[%s4 + $0x4] sm:$0xf]
      %v910 = vld [vmem:[%s4 + $0x8] sm:$0xf]
      %v911 = vld [vmem:[%s4 + $0xc] sm:$0xf]
      %v912 = vld [vmem:[%s4 + $0x10] sm:$0xf]
      %v913 = vld [vmem:[%s4 + $0x14] sm:$0xf]
      %v914 = vld [vmem:[%s4 + $0x18] sm:$0xf]
      %v915 = vld [vmem:[%s4 + $0x1c] sm:$0xf]
      %v916 = vld [vmem:[%s4 + $0x20] sm:$0xf]
      %v917 = vld [vmem:[%s4 + $0x24] sm:$0xf]
      %v918 = vld [vmem:[%s4 + $0x28] sm:$0xf]
      %v919 = vld [vmem:[%s4 + $0x2c] sm:$0xf]
      %v920 = vld [vmem:[%s4 + $0x30] sm:$0xf]
      %v921 = vld [vmem:[%s4 + $0x34] sm:$0xf]
      %v922 = vld [vmem:[%s4 + $0x38] sm:$0xf]
      %v923 = vld [vmem:[%s4 + $0x3c] sm:$0xf]
      %v924 = vld [vmem:[%s5] sm:$0xf]
      %v926 = vsel %vm503, %v924, 0
      %928 = vmatpush.bf16.msra.mxu0 0
      %929 = vmatpush.bf16.msra.mxu0 0
      %930 = vmatpush.bf16.msra.mxu0 0
      %931 = vmatpush.bf16.msra.mxu0 0
      %932 = vmatpush.bf16.msra.mxu0 0
      %933 = vmatpush.bf16.msra.mxu0 0
      %934 = vmatpush.bf16.msra.mxu0 0
      %935 = vmatpush.bf16.msra.mxu0 %v926
      %936 = vmatmul.bf16.gmra.mxu0 %v456
      %v937 = vpop.f32.mrf.mxu0
      %v938 = vadd.f32 0.0, %v937
      %v939 = vpop.f32.mrf.mxu0
      %v940 = vadd.f32 0.0, %v939
      %941 = vmatmul.bf16.gmra.mxu0 %v459
      %v942 = vpop.f32.mrf.mxu0
      %v943 = vadd.f32 0.0, %v942
      %v944 = vpop.f32.mrf.mxu0
      %v945 = vadd.f32 0.0, %v944
      %946 = vmatmul.bf16.gmra.mxu0 %v462
      %v947 = vpop.f32.mrf.mxu0
      %v948 = vadd.f32 0.0, %v947
      %v949 = vpop.f32.mrf.mxu0
      %v950 = vadd.f32 0.0, %v949
      %951 = vmatmul.bf16.gmra.mxu0 %v465
      %v952 = vpop.f32.mrf.mxu0
      %v953 = vadd.f32 0.0, %v952
      %v954 = vpop.f32.mrf.mxu0
      %v955 = vadd.f32 0.0, %v954
      %956 = vmatmul.bf16.gmra.mxu0 %v468
      %v957 = vpop.f32.mrf.mxu0
      %v958 = vadd.f32 0.0, %v957
      %v959 = vpop.f32.mrf.mxu0
      %v960 = vadd.f32 0.0, %v959
      %961 = vmatmul.bf16.gmra.mxu0 %v471
      %v962 = vpop.f32.mrf.mxu0
      %v963 = vadd.f32 0.0, %v962
      %v964 = vpop.f32.mrf.mxu0
      %v965 = vadd.f32 0.0, %v964
      %966 = vmatmul.bf16.gmra.mxu0 %v474
      %v967 = vpop.f32.mrf.mxu0
      %v968 = vadd.f32 0.0, %v967
      %v969 = vpop.f32.mrf.mxu0
      %v970 = vadd.f32 0.0, %v969
      %971 = vmatmul.bf16.gmra.mxu0 %v477
      %v972 = vpop.f32.mrf.mxu0
      %v973 = vadd.f32 0.0, %v972
      %v974 = vpop.f32.mrf.mxu0
      %v975 = vadd.f32 0.0, %v974
      %976 = vmatmul.bf16.gmra.mxu0 %v480
      %v977 = vpop.f32.mrf.mxu0
      %v978 = vadd.f32 0.0, %v977
      %v979 = vpop.f32.mrf.mxu0
      %v980 = vadd.f32 0.0, %v979
      %981 = vmatmul.bf16.gmra.mxu0 %v483
      %v982 = vpop.f32.mrf.mxu0
      %v983 = vadd.f32 0.0, %v982
      %v984 = vpop.f32.mrf.mxu0
      %v985 = vadd.f32 0.0, %v984
      %986 = vmatmul.bf16.gmra.mxu0 %v486
      %v987 = vpop.f32.mrf.mxu0
      %v988 = vadd.f32 0.0, %v987
      %v989 = vpop.f32.mrf.mxu0
      %v990 = vadd.f32 0.0, %v989
      %991 = vmatmul.bf16.gmra.mxu0 %v489
      %v992 = vpop.f32.mrf.mxu0
      %v993 = vadd.f32 0.0, %v992
      %v994 = vpop.f32.mrf.mxu0
      %v995 = vadd.f32 0.0, %v994
      %996 = vmatmul.bf16.gmra.mxu0 %v492
      %v997 = vpop.f32.mrf.mxu0
      %v998 = vadd.f32 0.0, %v997
      %v999 = vpop.f32.mrf.mxu0
      %v1000 = vadd.f32 0.0, %v999
      %1001 = vmatmul.bf16.gmra.mxu0 %v495
      %v1002 = vpop.f32.mrf.mxu0
      %v1003 = vadd.f32 0.0, %v1002
      %v1004 = vpop.f32.mrf.mxu0
      %v1005 = vadd.f32 0.0, %v1004
      %1006 = vmatmul.bf16.gmra.mxu0 %v498
      %v1007 = vpop.f32.mrf.mxu0
      %v1008 = vadd.f32 0.0, %v1007
      %v1009 = vpop.f32.mrf.mxu0
      %v1010 = vadd.f32 0.0, %v1009
      %1011 = vmatmul.bf16.gmra.mxu0 %v501
      %v1012 = vpop.f32.mrf.mxu0
      %v1013 = vadd.f32 0.0, %v1012
      %v1014 = vpop.f32.mrf.mxu0
      %v1015 = vadd.f32 0.0, %v1014
      %1016 = vdwg.mxu0
      %v1033 = vunpack.c.l.b16 %v908
      %v1034 = vunpack.c.l.b16 %v909
      %v1035 = vunpack.c.l.b16 %v910
      %v1036 = vunpack.c.l.b16 %v911
      %v1037 = vunpack.c.l.b16 %v912
      %v1038 = vunpack.c.l.b16 %v913
      %v1039 = vunpack.c.l.b16 %v914
      %v1040 = vunpack.c.l.b16 %v915
      %v1041 = vunpack.c.l.b16 %v916
      %v1042 = vunpack.c.l.b16 %v917
      %v1043 = vunpack.c.l.b16 %v918
      %v1044 = vunpack.c.l.b16 %v919
      %v1045 = vunpack.c.l.b16 %v920
      %v1046 = vunpack.c.l.b16 %v921
      %v1047 = vunpack.c.l.b16 %v922
      %v1048 = vunpack.c.l.b16 %v923
      %v1049 = vpack.c.b16 %v1034, %v1033
      %v1050 = vpack.c.b16 %v1036, %v1035
      %v1051 = vpack.c.b16 %v1038, %v1037
      %v1052 = vpack.c.b16 %v1040, %v1039
      %v1053 = vpack.c.b16 %v1042, %v1041
      %v1054 = vpack.c.b16 %v1044, %v1043
      %v1055 = vpack.c.b16 %v1046, %v1045
      %v1056 = vpack.c.b16 %v1048, %v1047
      %1065 = vmatpush.bf16.msra.mxu0 %v1056
      %1066 = vmatpush.bf16.msra.mxu0 %v1055
      %1067 = vmatpush.bf16.msra.mxu0 %v1054
      %1068 = vmatpush.bf16.msra.mxu0 %v1053
      %1069 = vmatpush.bf16.msra.mxu0 %v1052
      %1070 = vmatpush.bf16.msra.mxu0 %v1051
      %1071 = vmatpush.bf16.msra.mxu0 %v1050
      %1072 = vmatpush.bf16.msra.mxu0 %v1049
      %1073 = vmatmul.bf16.gmra.mxu0 %v892
      %v1074 = vpop.f32.mrf.mxu0
      %v1075 = vadd.f32 %v938, %v1074
      %v1076 = vpop.f32.mrf.mxu0
      %v1077 = vadd.f32 %v940, %v1076
      %1078 = vmatmul.bf16.gmra.mxu0 %v893
      %v1079 = vpop.f32.mrf.mxu0
      %v1080 = vadd.f32 %v943, %v1079
      %v1081 = vpop.f32.mrf.mxu0
      %v1082 = vadd.f32 %v945, %v1081
      %1083 = vmatmul.bf16.gmra.mxu0 %v894
      %v1084 = vpop.f32.mrf.mxu0
      %v1085 = vadd.f32 %v948, %v1084
      %v1086 = vpop.f32.mrf.mxu0
      %v1087 = vadd.f32 %v950, %v1086
      %1088 = vmatmul.bf16.gmra.mxu0 %v895
      %v1089 = vpop.f32.mrf.mxu0
      %v1090 = vadd.f32 %v953, %v1089
      %v1091 = vpop.f32.mrf.mxu0
      %v1092 = vadd.f32 %v955, %v1091
      %1093 = vmatmul.bf16.gmra.mxu0 %v896
      %v1094 = vpop.f32.mrf.mxu0
      %v1095 = vadd.f32 %v958, %v1094
      %v1096 = vpop.f32.mrf.mxu0
      %v1097 = vadd.f32 %v960, %v1096
      %1098 = vmatmul.bf16.gmra.mxu0 %v897
      %v1099 = vpop.f32.mrf.mxu0
      %v1100 = vadd.f32 %v963, %v1099
      %v1101 = vpop.f32.mrf.mxu0
      %v1102 = vadd.f32 %v965, %v1101
      %1103 = vmatmul.bf16.gmra.mxu0 %v898
      %v1104 = vpop.f32.mrf.mxu0
      %v1105 = vadd.f32 %v968, %v1104
      %v1106 = vpop.f32.mrf.mxu0
      %v1107 = vadd.f32 %v970, %v1106
      %1108 = vmatmul.bf16.gmra.mxu0 %v899
      %v1109 = vpop.f32.mrf.mxu0
      %v1110 = vadd.f32 %v973, %v1109
      %v1111 = vpop.f32.mrf.mxu0
      %v1112 = vadd.f32 %v975, %v1111
      %1113 = vmatmul.bf16.gmra.mxu0 %v900
      %v1114 = vpop.f32.mrf.mxu0
      %v1115 = vadd.f32 %v978, %v1114
      %v1116 = vpop.f32.mrf.mxu0
      %v1117 = vadd.f32 %v980, %v1116
      %1118 = vmatmul.bf16.gmra.mxu0 %v901
      %v1119 = vpop.f32.mrf.mxu0
      %v1120 = vadd.f32 %v983, %v1119
      %v1121 = vpop.f32.mrf.mxu0
      %v1122 = vadd.f32 %v985, %v1121
      %1123 = vmatmul.bf16.gmra.mxu0 %v902
      %v1124 = vpop.f32.mrf.mxu0
      %v1125 = vadd.f32 %v988, %v1124
      %v1126 = vpop.f32.mrf.mxu0
      %v1127 = vadd.f32 %v990, %v1126
      %1128 = vmatmul.bf16.gmra.mxu0 %v903
      %v1129 = vpop.f32.mrf.mxu0
      %v1130 = vadd.f32 %v993, %v1129
      %v1131 = vpop.f32.mrf.mxu0
      %v1132 = vadd.f32 %v995, %v1131
      %1133 = vmatmul.bf16.gmra.mxu0 %v904
      %v1134 = vpop.f32.mrf.mxu0
      %v1135 = vadd.f32 %v998, %v1134
      %v1136 = vpop.f32.mrf.mxu0
      %v1137 = vadd.f32 %v1000, %v1136
      %1138 = vmatmul.bf16.gmra.mxu0 %v905
      %v1139 = vpop.f32.mrf.mxu0
      %v1140 = vadd.f32 %v1003, %v1139
      %v1141 = vpop.f32.mrf.mxu0
      %v1142 = vadd.f32 %v1005, %v1141
      %1143 = vmatmul.bf16.gmra.mxu0 %v906
      %v1144 = vpop.f32.mrf.mxu0
      %v1145 = vadd.f32 %v1008, %v1144
      %v1146 = vpop.f32.mrf.mxu0
      %v1147 = vadd.f32 %v1010, %v1146
      %1148 = vmatmul.bf16.gmra.mxu0 %v907
      %v1149 = vpop.f32.mrf.mxu0
      %v1150 = vadd.f32 %v1013, %v1149
      %v1151 = vpop.f32.mrf.mxu0
      %v1152 = vadd.f32 %v1015, %v1151
      %1153 = vdwg.mxu0
      %v1154 = vld [vmem:[%s6 + $0x1] sm:$0x1]
      %v1155 = vperm.slane %v1154, 0
      %v1156 = vadd.f32 %v1075, %v1155
      %v1157 = vadd.f32 %v1077, %v1155
      %v1158 = vadd.f32 %v1080, %v1155
      %v1159 = vadd.f32 %v1082, %v1155
      %v1160 = vadd.f32 %v1085, %v1155
      %v1161 = vadd.f32 %v1087, %v1155
      %v1162 = vadd.f32 %v1090, %v1155
      %v1163 = vadd.f32 %v1092, %v1155
      %v1164 = vadd.f32 %v1095, %v1155
      %v1165 = vadd.f32 %v1097, %v1155
      %v1166 = vadd.f32 %v1100, %v1155
      %v1167 = vadd.f32 %v1102, %v1155
      %v1168 = vadd.f32 %v1105, %v1155
      %v1169 = vadd.f32 %v1107, %v1155
      %v1170 = vadd.f32 %v1110, %v1155
      %v1171 = vadd.f32 %v1112, %v1155
      %v1172 = vadd.f32 %v1115, %v1155
      %v1173 = vadd.f32 %v1117, %v1155
      %v1174 = vadd.f32 %v1120, %v1155
      %v1175 = vadd.f32 %v1122, %v1155
      %v1176 = vadd.f32 %v1125, %v1155
      %v1177 = vadd.f32 %v1127, %v1155
      %v1178 = vadd.f32 %v1130, %v1155
      %v1179 = vadd.f32 %v1132, %v1155
      %v1180 = vadd.f32 %v1135, %v1155
      %v1181 = vadd.f32 %v1137, %v1155
      %v1182 = vadd.f32 %v1140, %v1155
      %v1183 = vadd.f32 %v1142, %v1155
      %v1184 = vadd.f32 %v1145, %v1155
      %v1185 = vadd.f32 %v1147, %v1155
      %v1186 = vadd.f32 %v1150, %v1155
      %v1187 = vadd.f32 %v1152, %v1155
      %v1188 = vmax.f32 %v1156, 0.0
      %v1189 = vmax.f32 %v1157, 0.0
      %v1190 = vmax.f32 %v1158, 0.0
      %v1191 = vmax.f32 %v1159, 0.0
      %v1192 = vmax.f32 %v1160, 0.0
      %v1193 = vmax.f32 %v1161, 0.0
      %v1194 = vmax.f32 %v1162, 0.0
      %v1195 = vmax.f32 %v1163, 0.0
      %v1196 = vmax.f32 %v1164, 0.0
      %v1197 = vmax.f32 %v1165, 0.0
      %v1198 = vmax.f32 %v1166, 0.0
      %v1199 = vmax.f32 %v1167, 0.0
      %v1200 = vmax.f32 %v1168, 0.0
      %v1201 = vmax.f32 %v1169, 0.0
      %v1202 = vmax.f32 %v1170, 0.0
      %v1203 = vmax.f32 %v1171, 0.0
      %v1204 = vmax.f32 %v1172, 0.0
      %v1205 = vmax.f32 %v1173, 0.0
      %v1206 = vmax.f32 %v1174, 0.0
      %v1207 = vmax.f32 %v1175, 0.0
      %v1208 = vmax.f32 %v1176, 0.0
      %v1209 = vmax.f32 %v1177, 0.0
      %v1210 = vmax.f32 %v1178, 0.0
      %v1211 = vmax.f32 %v1179, 0.0
      %v1212 = vmax.f32 %v1180, 0.0
      %v1213 = vmax.f32 %v1181, 0.0
      %v1214 = vmax.f32 %v1182, 0.0
      %v1215 = vmax.f32 %v1183, 0.0
      %v1216 = vmax.f32 %v1184, 0.0
      %v1217 = vmax.f32 %v1185, 0.0
      %v1218 = vmax.f32 %v1186, 0.0
      %v1219 = vmax.f32 %v1187, 0.0
      %vm1220 = vcmask 130048
      %1221 = vst.msk [vmem:[%s302] sm:$0xff] %vm1220, %v1188
      %1222 = vst.msk [vmem:[%s302 + $0x8] sm:$0xff] %vm1220, %v1189
      %1223 = vst.msk [vmem:[%s302 + $0x10] sm:$0xff] %vm1220, %v1190
      %1224 = vst.msk [vmem:[%s302 + $0x18] sm:$0xff] %vm1220, %v1191
      %1225 = vst.msk [vmem:[%s302 + $0x20] sm:$0xff] %vm1220, %v1192
      %1226 = vst.msk [vmem:[%s302 + $0x28] sm:$0xff] %vm1220, %v1193
      %1227 = vst.msk [vmem:[%s302 + $0x30] sm:$0xff] %vm1220, %v1194
      %1228 = vst.msk [vmem:[%s302 + $0x38] sm:$0xff] %vm1220, %v1195
      %1229 = vst.msk [vmem:[%s302 + $0x40] sm:$0xff] %vm1220, %v1196
      %1230 = vst.msk [vmem:[%s302 + $0x48] sm:$0xff] %vm1220, %v1197
      %1231 = vst.msk [vmem:[%s302 + $0x50] sm:$0xff] %vm1220, %v1198
      %1232 = vst.msk [vmem:[%s302 + $0x58] sm:$0xff] %vm1220, %v1199
      %1233 = vst.msk [vmem:[%s302 + $0x60] sm:$0xff] %vm1220, %v1200
      %1234 = vst.msk [vmem:[%s302 + $0x68] sm:$0xff] %vm1220, %v1201
      %1235 = vst.msk [vmem:[%s302 + $0x70] sm:$0xff] %vm1220, %v1202
      %1236 = vst.msk [vmem:[%s302 + $0x78] sm:$0xff] %vm1220, %v1203
      %1237 = vst.msk [vmem:[%s302 + $0x80] sm:$0xff] %vm1220, %v1204
      %1238 = vst.msk [vmem:[%s302 + $0x88] sm:$0xff] %vm1220, %v1205
      %1239 = vst.msk [vmem:[%s302 + $0x90] sm:$0xff] %vm1220, %v1206
      %1240 = vst.msk [vmem:[%s302 + $0x98] sm:$0xff] %vm1220, %v1207
      %1241 = vst.msk [vmem:[%s302 + $0xa0] sm:$0xff] %vm1220, %v1208
      %1242 = vst.msk [vmem:[%s302 + $0xa8] sm:$0xff] %vm1220, %v1209
      %1243 = vst.msk [vmem:[%s302 + $0xb0] sm:$0xff] %vm1220, %v1210
      %1244 = vst.msk [vmem:[%s302 + $0xb8] sm:$0xff] %vm1220, %v1211
      %1245 = vst.msk [vmem:[%s302 + $0xc0] sm:$0xff] %vm1220, %v1212
      %1246 = vst.msk [vmem:[%s302 + $0xc8] sm:$0xff] %vm1220, %v1213
      %1247 = vst.msk [vmem:[%s302 + $0xd0] sm:$0xff] %vm1220, %v1214
      %1248 = vst.msk [vmem:[%s302 + $0xd8] sm:$0xff] %vm1220, %v1215
      %1249 = vst.msk [vmem:[%s302 + $0xe0] sm:$0xff] %vm1220, %v1216
      %1250 = vst.msk [vmem:[%s302 + $0xe8] sm:$0xff] %vm1220, %v1217
      %1251 = vst.msk [vmem:[%s302 + $0xf0] sm:$0xff] %vm1220, %v1218
      %1252 = vst.msk [vmem:[%s302 + $0xf8] sm:$0xff] %vm1220, %v1219
      %s1253 = smul.u32 32, %s18
      %p1254 = scmp.lt.s32.totalorder %s1253, 63
      %s1255 = scalar_select %p1254, %s1253, 63
      %s1256 = smul.addr %s1255, 8
      %s1257 = scalar_lea.vmem %s7, %s1256
      // Predicated region
      $region49: #{tpu_custom_call.1} parent=47 // pred_check
        %p1258 = pneg %p193
      $region50: #{tpu_custom_call.1} parent=47 // pred_check_branch
        %1260 = sbr.rel (%p1258) target = $region52
      $region51: #{tpu_custom_call.1} parent=47 // pred_region
        %s1261 = smul.u32 32, %s18
      $region52: #{tpu_custom_call.1} parent=47 // pred_fallthru
        _
    $region48: #{tpu_custom_call.1} parent=5 // pred_fallthru
      _
    %p1262 = scmp.le.s32.totalorder 2, %s13
    // Predicated region
    $region53: #{tpu_custom_call.1} parent=5 // pred_check
      %p1263 = pneg %p1262
    $region54: #{tpu_custom_call.1} parent=5 // pred_check_branch
      %1265 = sbr.rel (%p1263) target = $region56
    $region55: #{tpu_custom_call.1} parent=5 // pred_region
      %s1266 = ssub.s32 %s13, 2
      // Predicated region
      $region57: #{tpu_custom_call.1} parent=55 // pred_check
        %p1267 = pneg %p199
      $region58: #{tpu_custom_call.1} parent=55 // pred_check_branch
        %1269 = sbr.rel (%p1267) target = $region60
      $region59: #{tpu_custom_call.1} parent=55 // pred_region
        %s1270 = smul.u32 32, %s19
        %p1271 = scmp.lt.s32.totalorder %s1270, 63
        %s1272 = scalar_select %p1271, %s1270, 63
        %s1273 = smul.addr %s1272, 8
        %s1274 = scalar_lea.vmem %s7, %s1273
      $region60: #{tpu_custom_call.1} parent=55 // pred_fallthru
        _
    $region56: #{tpu_custom_call.1} parent=5 // pred_fallthru
      _
  $region6: #{tpu_custom_call.1} parent=0 // loop_footer
    %s17 = sadd.s32 1, %s13
  $region7: #{tpu_custom_call.1} parent=0 // loop_footer_branch
    %12 = sbr.rel target = $region3
  $region8: #{tpu_custom_call.1} parent=0 // loop_exit
    _

// kernel: tpu_custom_call.1
$region0: #{tpu_custom_call.1}
  #allocation0 [shape = 'u32[]', space=smem, size = 0x4, offset = 0x4, fixed_abs, tag = 'smem constant byte address 0x4 - core index']
  #allocation1 [shape = 'u32[72,128]{1,0:T(1,128)}', space=vmem, size = 0x9000, scoped, tag = 'internal scratch']
  %s0 = inlined_call_operand.vmem [shape: bf16[512,32], index: 0, kind: input, shape index: {}]
  %s1 = inlined_call_operand.vmem [shape: bf16[512,8], index: 1, kind: input, shape index: {}]
  %s2 = inlined_call_operand.vmem [shape: bf16[32,128], index: 2, kind: input, shape index: {}]
  %s3 = inlined_call_operand.vmem [shape: bf16[8,128], index: 3, kind: input, shape index: {}]
  %s4 = inlined_call_operand.vmem [shape: bf16[128,16], index: 4, kind: input, shape index: {}]
  %s5 = inlined_call_operand.vmem [shape: bf16[8,16], index: 5, kind: input, shape index: {}]
  %s6 = inlined_call_operand.vmem [shape: f32[2,128], index: 6, kind: input, shape index: {}]
  %s7 = inlined_call_operand.vmem [shape: f32[512,16], index: 7, kind: output, shape index: {}]
  %s8 = sld [smem:[#allocation0]]
  $region61: #{tpu_custom_call.1} parent=0
    _
  %s10 = ssub.s32 1, %s8
  %s11 = scalar_select 0, %s10, %s8
  loop: start=0, step=1, limit=4
  $region2: #{tpu_custom_call.1} parent=0 // loop_pre_header
    _
  $region3: #{tpu_custom_call.1} parent=0 // loop_header
    %s13 = sphi 0, %s17
    %p14 = scmp.ge.s32.totalorder %s13, 4
    %s23 = sphi 0, %s25
    %s26 = sphi 0, %s23
    %s27 = sphi 0, %s26
    %s43 = sphi 0, %s27
    %s49 = sphi 0, %s51
    %s52 = sphi 0, %s49
    %s53 = sphi 0, %s52
    %s69 = sphi 0, %s53
    %s73 = sphi 0, %s73
    %s75 = sphi 0, %s73
    %s76 = sphi 0, %s75
    %s90 = sphi 0, %s76
    %s94 = sphi 0, %s94
    %s96 = sphi 0, %s94
    %s97 = sphi 0, %s96
    %s111 = sphi 0, %s97
    %s115 = sphi 0, %s115
    %s117 = sphi 0, %s115
    %s118 = sphi 0, %s117
    %s132 = sphi 0, %s118
    %s136 = sphi 0, %s136
    %s138 = sphi 0, %s136
    %s139 = sphi 0, %s138
    %s153 = sphi 0, %s139
    %s157 = sphi 0, %s157
    %s159 = sphi 0, %s157
    %s160 = sphi 0, %s159
    %s174 = sphi 0, %s160
    %s180 = sphi 0, %s182
    %s183 = sphi 0, %s180
    %s184 = sphi 0, %s183
    %s200 = sphi 0, %s184
  $region4: #{tpu_custom_call.1} parent=0 // loop_header_branch
    %16 = sbr.rel (%p14) target = $region8
  $region5: #{tpu_custom_call.1} parent=0 // loop_body
    %s18 = ssub.s32 %s13, 1
    %s19 = ssub.s32 %s13, 2
    %s20 = sadd.s32 %s13, 1
    %s21 = ssub.s32 %s13, %s20
    %p22 = scmp.eq.s32.totalorder %s21, 0
    %s24 = sadd.s32 %s23, 1
    %s25 = scalar_select %p22, %s23, %s24
    %p28 = pneg %p22
    %p29 = scmp.eq.s32.totalorder %s13, 1
    %p30 = por %p28, %p29
    %p31 = scmp.ne.s32.totalorder %s23, %s26
    %p32 = scmp.eq.s32.totalorder %s13, 0
    %p33 = por %p31, %p32
    %p34 = scmp.ne.s32.totalorder %s23, %s26
    %p35 = scmp.eq.s32.totalorder %s18, 1
    %p36 = por %p34, %p35
    %p37 = scmp.ne.s32.totalorder %s26, %s27
    %p38 = scmp.eq.s32.totalorder %s18, 0
    %p39 = por %p37, %p38
    %p40 = scmp.ne.s32.totalorder %s26, %s27
    %p41 = scmp.eq.s32.totalorder %s19, 1
    %p42 = por %p40, %p41
    %p44 = scmp.ne.s32.totalorder %s27, %s43
    %p45 = scmp.eq.s32.totalorder %s19, 0
    %p46 = por %p44, %p45
    %s47 = ssub.s32 %s13, %s20
    %p48 = scmp.eq.s32.totalorder %s47, 0
    %s50 = sadd.s32 %s49, 1
    %s51 = scalar_select %p48, %s49, %s50
    %p54 = pneg %p48
    %p55 = scmp.eq.s32.totalorder %s13, 1
    %p56 = por %p54, %p55
    %p57 = scmp.ne.s32.totalorder %s49, %s52
    %p58 = scmp.eq.s32.totalorder %s13, 0
    %p59 = por %p57, %p58
    %p60 = scmp.ne.s32.totalorder %s49, %s52
    %p61 = scmp.eq.s32.totalorder %s18, 1
    %p62 = por %p60, %p61
    %p63 = scmp.ne.s32.totalorder %s52, %s53
    %p64 = scmp.eq.s32.totalorder %s18, 0
    %p65 = por %p63, %p64
    %p66 = scmp.ne.s32.totalorder %s52, %s53
    %p67 = scmp.eq.s32.totalorder %s19, 1
    %p68 = por %p66, %p67
    %p70 = scmp.ne.s32.totalorder %s53, %s69
    %p71 = scmp.eq.s32.totalorder %s19, 0
    %p72 = por %p70, %p71
    %s74 = sadd.s32 %s73, 1
    %p77 = scmp.eq.s32.totalorder %s13, 1
    %p78 = scmp.ne.s32.totalorder %s73, %s75
    %p79 = scmp.eq.s32.totalorder %s13, 0
    %p80 = por %p78, %p79
    %p81 = scmp.ne.s32.totalorder %s73, %s75
    %p82 = scmp.eq.s32.totalorder %s18, 1
    %p83 = por %p81, %p82
    %p84 = scmp.ne.s32.totalorder %s75, %s76
    %p85 = scmp.eq.s32.totalorder %s18, 0
    %p86 = por %p84, %p85
    %p87 = scmp.ne.s32.totalorder %s75, %s76
    %p88 = scmp.eq.s32.totalorder %s19, 1
    %p89 = por %p87, %p88
    %p91 = scmp.ne.s32.totalorder %s76, %s90
    %p92 = scmp.eq.s32.totalorder %s19, 0
    %p93 = por %p91, %p92
    %s95 = sadd.s32 %s94, 1
    %p98 = scmp.eq.s32.totalorder %s13, 1
    %p99 = scmp.ne.s32.totalorder %s94, %s96
    %p100 = scmp.eq.s32.totalorder %s13, 0
    %p101 = por %p99, %p100
    %p102 = scmp.ne.s32.totalorder %s94, %s96
    %p103 = scmp.eq.s32.totalorder %s18, 1
    %p104 = por %p102, %p103
    %p105 = scmp.ne.s32.totalorder %s96, %s97
    %p106 = scmp.eq.s32.totalorder %s18, 0
    %p107 = por %p105, %p106
    %p108 = scmp.ne.s32.totalorder %s96, %s97
    %p109 = scmp.eq.s32.totalorder %s19, 1
    %p110 = por %p108, %p109
    %p112 = scmp.ne.s32.totalorder %s97, %s111
    %p113 = scmp.eq.s32.totalorder %s19, 0
    %p114 = por %p112, %p113
    %s116 = sadd.s32 %s115, 1
    %p119 = scmp.eq.s32.totalorder %s13, 1
    %p120 = scmp.ne.s32.totalorder %s115, %s117
    %p121 = scmp.eq.s32.totalorder %s13, 0
    %p122 = por %p120, %p121
    %p123 = scmp.ne.s32.totalorder %s115, %s117
    %p124 = scmp.eq.s32.totalorder %s18, 1
    %p125 = por %p123, %p124
    %p126 = scmp.ne.s32.totalorder %s117, %s118
    %p127 = scmp.eq.s32.totalorder %s18, 0
    %p128 = por %p126, %p127
    %p129 = scmp.ne.s32.totalorder %s117, %s118
    %p130 = scmp.eq.s32.totalorder %s19, 1
    %p131 = por %p129, %p130
    %p133 = scmp.ne.s32.totalorder %s118, %s132
    %p134 = scmp.eq.s32.totalorder %s19, 0
    %p135 = por %p133, %p134
    %s137 = sadd.s32 %s136, 1
    %p140 = scmp.eq.s32.totalorder %s13, 1
    %p141 = scmp.ne.s32.totalorder %s136, %s138
    %p142 = scmp.eq.s32.totalorder %s13, 0
    %p143 = por %p141, %p142
    %p144 = scmp.ne.s32.totalorder %s136, %s138
    %p145 = scmp.eq.s32.totalorder %s18, 1
    %p146 = por %p144, %p145
    %p147 = scmp.ne.s32.totalorder %s138, %s139
    %p148 = scmp.eq.s32.totalorder %s18, 0
    %p149 = por %p147, %p148
    %p150 = scmp.ne.s32.totalorder %s138, %s139
    %p151 = scmp.eq.s32.totalorder %s19, 1
    %p152 = por %p150, %p151
    %p154 = scmp.ne.s32.totalorder %s139, %s153
    %p155 = scmp.eq.s32.totalorder %s19, 0
    %p156 = por %p154, %p155
    %s158 = sadd.s32 %s157, 1
    %p161 = scmp.eq.s32.totalorder %s13, 1
    %p162 = scmp.ne.s32.totalorder %s157, %s159
    %p163 = scmp.eq.s32.totalorder %s13, 0
    %p164 = por %p162, %p163
    %p165 = scmp.ne.s32.totalorder %s157, %s159
    %p166 = scmp.eq.s32.totalorder %s18, 1
    %p167 = por %p165, %p166
    %p168 = scmp.ne.s32.totalorder %s159, %s160
    %p169 = scmp.eq.s32.totalorder %s18, 0
    %p170 = por %p168, %p169
    %p171 = scmp.ne.s32.totalorder %s159, %s160
    %p172 = scmp.eq.s32.totalorder %s19, 1
    %p173 = por %p171, %p172
    %p175 = scmp.ne.s32.totalorder %s160, %s174
    %p176 = scmp.eq.s32.totalorder %s19, 0
    %p177 = por %p175, %p176
    %s178 = ssub.s32 %s13, %s20
    %p179 = scmp.eq.s32.totalorder %s178, 0
    %s181 = sadd.s32 %s180, 1
    %s182 = scalar_select %p179, %s180, %s181
    %p185 = pneg %p179
    %p186 = scmp.eq.s32.totalorder %s13, 1
    %p187 = por %p185, %p186
    %p188 = scmp.ne.s32.totalorder %s180, %s183
    %p189 = scmp.eq.s32.totalorder %s13, 0
    %p190 = por %p188, %p189
    %p191 = scmp.ne.s32.totalorder %s180, %s183
    %p192 = scmp.eq.s32.totalorder %s18, 1
    %p193 = por %p191, %p192
    %p194 = scmp.ne.s32.totalorder %s183, %s184
    %p195 = scmp.eq.s32.totalorder %s18, 0
    %p196 = por %p194, %p195
    %p197 = scmp.ne.s32.totalorder %s183, %s184
    %p198 = scmp.eq.s32.totalorder %s19, 1
    %p199 = por %p197, %p198
    %p201 = scmp.ne.s32.totalorder %s184, %s200
    %p202 = scmp.eq.s32.totalorder %s19, 0
    %p203 = por %p201, %p202
    %p204 = scmp.le.s32.totalorder 1, %s13
    %p205 = scmp.lt.s32.totalorder %s13, 3
    %p206 = pnand %p204, %p205
    %p207 = pneg %p206
    // Predicated region
    $region9: #{tpu_custom_call.1} parent=5 // pred_check
      _
    $region10: #{tpu_custom_call.1} parent=5 // pred_check_branch
      %209 = sbr.rel (%p206) target = $region12
    $region11: #{tpu_custom_call.1} parent=5 // pred_region
      %s210 = ssub.s32 %s13, 1
      // Predicated region
      $region13: #{tpu_custom_call.1} parent=11 // pred_check
        %p211 = pneg %p86
      $region14: #{tpu_custom_call.1} parent=11 // pred_check_branch
        %213 = sbr.rel (%p211) target = $region16
      $region15: #{tpu_custom_call.1} parent=11 // pred_region
        _
      $region16: #{tpu_custom_call.1} parent=11 // pred_fallthru
        _
      // Predicated region
      $region17: #{tpu_custom_call.1} parent=11 // pred_check
        %p214 = pneg %p107
      $region18: #{tpu_custom_call.1} parent=11 // pred_check_branch
        %216 = sbr.rel (%p214) target = $region20
      $region19: #{tpu_custom_call.1} parent=11 // pred_region
        _
      $region20: #{tpu_custom_call.1} parent=11 // pred_fallthru
        _
      // Predicated region
      $region21: #{tpu_custom_call.1} parent=11 // pred_check
        %p217 = pneg %p128
      $region22: #{tpu_custom_call.1} parent=11 // pred_check_branch
        %219 = sbr.rel (%p217) target = $region24
      $region23: #{tpu_custom_call.1} parent=11 // pred_region
        _
      $region24: #{tpu_custom_call.1} parent=11 // pred_fallthru
        _
      // Predicated region
      $region25: #{tpu_custom_call.1} parent=11 // pred_check
        %p220 = pneg %p149
      $region26: #{tpu_custom_call.1} parent=11 // pred_check_branch
        %222 = sbr.rel (%p220) target = $region28
      $region27: #{tpu_custom_call.1} parent=11 // pred_region
        _
      $region28: #{tpu_custom_call.1} parent=11 // pred_fallthru
        _
      // Predicated region
      $region29: #{tpu_custom_call.1} parent=11 // pred_check
        %p223 = pneg %p170
      $region30: #{tpu_custom_call.1} parent=11 // pred_check_branch
        %225 = sbr.rel (%p223) target = $region32
      $region31: #{tpu_custom_call.1} parent=11 // pred_region
        _
      $region32: #{tpu_custom_call.1} parent=11 // pred_fallthru
        _
    $region12: #{tpu_custom_call.1} parent=5 // pred_fallthru
      _
    %p226 = scmp.lt.s32.totalorder %s13, 2
    // Predicated region
    $region33: #{tpu_custom_call.1} parent=5 // pred_check
      %p227 = pneg %p226
    $region34: #{tpu_custom_call.1} parent=5 // pred_check_branch
      %229 = sbr.rel (%p227) target = $region36
    $region35: #{tpu_custom_call.1} parent=5 // pred_region
      // Predicated region
      $region37: #{tpu_custom_call.1} parent=35 // pred_check
        %p230 = pneg %p33
      $region38: #{tpu_custom_call.1} parent=35 // pred_check_branch
        %232 = sbr.rel (%p230) target = $region40
      $region39: #{tpu_custom_call.1} parent=35 // pred_region
        %s233 = smul.u32 32, %s13
        %p234 = scmp.lt.s32.totalorder %s233, 63
        %s235 = scalar_select %p234, %s233, 63
        %s236 = smul.addr %s235, 4
        %s237 = scalar_lea.vmem %s0, %s236
        %s238 = smul.u32 32, %s13
      $region40: #{tpu_custom_call.1} parent=35 // pred_fallthru
        _
      // Predicated region
      $region41: #{tpu_custom_call.1} parent=35 // pred_check
        %p239 = pneg %p59
      $region42: #{tpu_custom_call.1} parent=35 // pred_check_branch
        %241 = sbr.rel (%p239) target = $region44
      $region43: #{tpu_custom_call.1} parent=35 // pred_region
        %s242 = smul.u32 32, %s13
        %p243 = scmp.lt.s32.totalorder %s242, 63
        %s244 = scalar_select %p243, %s242, 63
        %s245 = smul.addr %s244, 4
        %s246 = scalar_lea.vmem %s1, %s245
        %s247 = smul.u32 32, %s13
      $region44: #{tpu_custom_call.1} parent=35 // pred_fallthru
        _
    $region36: #{tpu_custom_call.1} parent=5 // pred_fallthru
      _
    %p248 = scmp.le.s32.totalorder 1, %s13
    %p249 = scmp.lt.s32.totalorder %s13, 3
    %p250 = pnand %p248, %p249
    %p251 = pneg %p250
    // Predicated region
    $region45: #{tpu_custom_call.1} parent=5 // pred_check
      _
    $region46: #{tpu_custom_call.1} parent=5 // pred_check_branch
      %253 = sbr.rel (%p250) target = $region48
    $region47: #{tpu_custom_call.1} parent=5 // pred_region
      %s254 = ssub.s32 %s13, 1
      %s255 = smul.u32 32, %s18
      %p256 = scmp.lt.s32.totalorder %s255, 63
      %s257 = scalar_select %p256, %s255, 63
      %s258 = smul.addr %s257, 4
      %s259 = scalar_lea.vmem %s0, %s258
      %p260 = pneg %p39
      %p261 = pneg %p36
      %s262 = smul.u32 32, %s18
      %p263 = scmp.lt.s32.totalorder %s262, 63
      %s264 = scalar_select %p263, %s262, 63
      %s265 = smul.addr %s264, 4
      %s266 = scalar_lea.vmem %s1, %s265
      %p267 = pneg %p65
      %p268 = pneg %p62
      %p269 = pneg %p86
      %p270 = pneg %p83
      %p271 = pneg %p107
      %p272 = pneg %p104
      %p273 = pneg %p128
      %p274 = pneg %p125
      %p275 = pneg %p149
      %p276 = pneg %p146
      %p277 = pneg %p170
      %p278 = pneg %p167
      %p279 = pneg %p196
      %p280 = pneg %p193
      %s281 = smul.u32 32, %s18
      %p282 = scmp.lt.s32.totalorder %s281, 63
      %s283 = scalar_select %p282, %s281, 63
      %s284 = smul.addr %s283, 8
      %s285 = scalar_lea.vmem %s7, %s284
      %s286 = smul.u32 32, %s18
      %p287 = scmp.lt.s32.totalorder %s286, 63
      %s288 = scalar_select %p287, %s286, 63
      %s289 = smul.addr %s288, 4
      %s290 = scalar_lea.vmem %s0, %s289
      %s291 = smul.u32 32, %s18
      %s292 = smul.u32 32, %s18
      %p293 = scmp.lt.s32.totalorder %s292, 63
      %s294 = scalar_select %p293, %s292, 63
      %s295 = smul.addr %s294, 4
      %s296 = scalar_lea.vmem %s1, %s295
      %s297 = smul.u32 32, %s18
      %s298 = smul.u32 32, %s18
      %p299 = scmp.lt.s32.totalorder %s298, 63
      %s300 = scalar_select %p299, %s298, 63
      %s301 = smul.addr %s300, 8
      %s302 = scalar_lea.vmem %s7, %s301
      %s303 = smul.u32 32, %s18
      %v305 = vld [vmem:[%s296] sm:$0xf]
      %v306 = vld [vmem:[%s296 + $0x4] sm:$0xf]
      %v307 = vld [vmem:[%s296 + $0x8] sm:$0xf]
      %v308 = vld [vmem:[%s296 + $0xc] sm:$0xf]
      %v309 = vld [vmem:[%s296 + $0x10] sm:$0xf]
      %v310 = vld [vmem:[%s296 + $0x14] sm:$0xf]
      %v311 = vld [vmem:[%s296 + $0x18] sm:$0xf]
      %v312 = vld [vmem:[%s296 + $0x1c] sm:$0xf]
      %v313 = vld [vmem:[%s296 + $0x20] sm:$0xf]
      %v314 = vld [vmem:[%s296 + $0x24] sm:$0xf]
      %v315 = vld [vmem:[%s296 + $0x28] sm:$0xf]
      %v316 = vld [vmem:[%s296 + $0x2c] sm:$0xf]
      %v317 = vld [vmem:[%s296 + $0x30] sm:$0xf]
      %v318 = vld [vmem:[%s296 + $0x34] sm:$0xf]
      %v319 = vld [vmem:[%s296 + $0x38] sm:$0xf]
      %v320 = vld [vmem:[%s296 + $0x3c] sm:$0xf]
      %v321 = vld [vmem:[%s296 + $0x40] sm:$0xf]
      %v322 = vld [vmem:[%s296 + $0x44] sm:$0xf]
      %v323 = vld [vmem:[%s296 + $0x48] sm:$0xf]
      %v324 = vld [vmem:[%s296 + $0x4c] sm:$0xf]
      %v325 = vld [vmem:[%s296 + $0x50] sm:$0xf]
      %v326 = vld [vmem:[%s296 + $0x54] sm:$0xf]
      %v327 = vld [vmem:[%s296 + $0x58] sm:$0xf]
      %v328 = vld [vmem:[%s296 + $0x5c] sm:$0xf]
      %v329 = vld [vmem:[%s296 + $0x60] sm:$0xf]
      %v330 = vld [vmem:[%s296 + $0x64] sm:$0xf]
      %v331 = vld [vmem:[%s296 + $0x68] sm:$0xf]
      %v332 = vld [vmem:[%s296 + $0x6c] sm:$0xf]
      %v333 = vld [vmem:[%s296 + $0x70] sm:$0xf]
      %v334 = vld [vmem:[%s296 + $0x74] sm:$0xf]
      %v335 = vld [vmem:[%s296 + $0x78] sm:$0xf]
      %v336 = vld [vmem:[%s296 + $0x7c] sm:$0xf]
      %v337 = vld [vmem:[%s290] sm:$0xf]
      %v338 = vld [vmem:[%s290 + $0x4] sm:$0xf]
      %v339 = vld [vmem:[%s290 + $0x8] sm:$0xf]
      %v340 = vld [vmem:[%s290 + $0xc] sm:$0xf]
      %v341 = vld [vmem:[%s290 + $0x10] sm:$0xf]
      %v342 = vld [vmem:[%s290 + $0x14] sm:$0xf]
      %v343 = vld [vmem:[%s290 + $0x18] sm:$0xf]
      %v344 = vld [vmem:[%s290 + $0x1c] sm:$0xf]
      %v345 = vld [vmem:[%s290 + $0x20] sm:$0xf]
      %v346 = vld [vmem:[%s290 + $0x24] sm:$0xf]
      %v347 = vld [vmem:[%s290 + $0x28] sm:$0xf]
      %v348 = vld [vmem:[%s290 + $0x2c] sm:$0xf]
      %v349 = vld [vmem:[%s290 + $0x30] sm:$0xf]
      %v350 = vld [vmem:[%s290 + $0x34] sm:$0xf]
      %v351 = vld [vmem:[%s290 + $0x38] sm:$0xf]
      %v352 = vld [vmem:[%s290 + $0x3c] sm:$0xf]
      %v353 = vld [vmem:[%s290 + $0x40] sm:$0xf]
      %v354 = vld [vmem:[%s290 + $0x44] sm:$0xf]
      %v355 = vld [vmem:[%s290 + $0x48] sm:$0xf]
      %v356 = vld [vmem:[%s290 + $0x4c] sm:$0xf]
      %v357 = vld [vmem:[%s290 + $0x50] sm:$0xf]
      %v358 = vld [vmem:[%s290 + $0x54] sm:$0xf]
      %v359 = vld [vmem:[%s290 + $0x58] sm:$0xf]
      %v360 = vld [vmem:[%s290 + $0x5c] sm:$0xf]
      %v361 = vld [vmem:[%s290 + $0x60] sm:$0xf]
      %v362 = vld [vmem:[%s290 + $0x64] sm:$0xf]
      %v363 = vld [vmem:[%s290 + $0x68] sm:$0xf]
      %v364 = vld [vmem:[%s290 + $0x6c] sm:$0xf]
      %v365 = vld [vmem:[%s290 + $0x70] sm:$0xf]
      %v366 = vld [vmem:[%s290 + $0x74] sm:$0xf]
      %v367 = vld [vmem:[%s290 + $0x78] sm:$0xf]
      %v368 = vld [vmem:[%s290 + $0x7c] sm:$0xf]
      %v369 = vld [vmem:[%s2] sm:$0xf]
      %v370 = vld [vmem:[%s2 + $0x4] sm:$0xf]
      %v371 = vld [vmem:[%s2 + $0x8] sm:$0xf]
      %v372 = vld [vmem:[%s2 + $0xc] sm:$0xf]
      %v373 = vld [vmem:[%s3] sm:$0xf]
      %v406 = vunpack.c.l.b16 %v305
      %v407 = vunpack.c.l.b16 %v306
      %v408 = vunpack.c.l.b16 %v307
      %v409 = vunpack.c.l.b16 %v308
      %v410 = vunpack.c.l.b16 %v309
      %v411 = vunpack.c.l.b16 %v310
      %v412 = vunpack.c.l.b16 %v311
      %v413 = vunpack.c.l.b16 %v312
      %v414 = vunpack.c.l.b16 %v313
      %v415 = vunpack.c.l.b16 %v314
      %v416 = vunpack.c.l.b16 %v315
      %v417 = vunpack.c.l.b16 %v316
      %v418 = vunpack.c.l.b16 %v317
      %v419 = vunpack.c.l.b16 %v318
      %v420 = vunpack.c.l.b16 %v319
      %v421 = vunpack.c.l.b16 %v320
      %v422 = vunpack.c.l.b16 %v321
      %v423 = vunpack.c.l.b16 %v322
      %v424 = vunpack.c.l.b16 %v323
      %v425 = vunpack.c.l.b16 %v324
      %v426 = vunpack.c.l.b16 %v325
      %v427 = vunpack.c.l.b16 %v326
      %v428 = vunpack.c.l.b16 %v327
      %v429 = vunpack.c.l.b16 %v328
      %v430 = vunpack.c.l.b16 %v329
      %v431 = vunpack.c.l.b16 %v330
      %v432 = vunpack.c.l.b16 %v331
      %v433 = vunpack.c.l.b16 %v332
      %v434 = vunpack.c.l.b16 %v333
      %v435 = vunpack.c.l.b16 %v334
      %v436 = vunpack.c.l.b16 %v335
      %v437 = vunpack.c.l.b16 %v336
      %v438 = vpack.c.b16 %v407, %v406
      %v439 = vpack.c.b16 %v409, %v408
      %v440 = vpack.c.b16 %v411, %v410
      %v441 = vpack.c.b16 %v413, %v412
      %v442 = vpack.c.b16 %v415, %v414
      %v443 = vpack.c.b16 %v417, %v416
      %v444 = vpack.c.b16 %v419, %v418
      %v445 = vpack.c.b16 %v421, %v420
      %v446 = vpack.c.b16 %v423, %v422
      %v447 = vpack.c.b16 %v425, %v424
      %v448 = vpack.c.b16 %v427, %v426
      %v449 = vpack.c.b16 %v429, %v428
      %v450 = vpack.c.b16 %v431, %v430
      %v451 = vpack.c.b16 %v433, %v432
      %v452 = vpack.c.b16 %v435, %v434
      %v453 = vpack.c.b16 %v437, %v436
      %vm454 = vcmask 64512
      %v456 = vsel %vm454, %v438, 0
      %v459 = vsel %vm454, %v439, 0
      %v462 = vsel %vm454, %v440, 0
      %v465 = vsel %vm454, %v441, 0
      %v468 = vsel %vm454, %v442, 0
      %v471 = vsel %vm454, %v443, 0
      %v474 = vsel %vm454, %v444, 0
      %v477 = vsel %vm454, %v445, 0
      %v480 = vsel %vm454, %v446, 0
      %v483 = vsel %vm454, %v447, 0
      %v486 = vsel %vm454, %v448, 0
      %v489 = vsel %vm454, %v449, 0
      %v492 = vsel %vm454, %v450, 0
      %v495 = vsel %vm454, %v451, 0
      %v498 = vsel %vm454, %v452, 0
      %v501 = vsel %vm454, %v453, 0
      %vm503 = vcmask 1043456
      %v505 = vsel %vm503, %v373, 0
      %507 = vmatpush.bf16.msra.mxu0 0
      %508 = vmatpush.bf16.msra.mxu0 0
      %509 = vmatpush.bf16.msra.mxu0 0
      %510 = vmatpush.bf16.msra.mxu0 0
      %511 = vmatpush.bf16.msra.mxu0 0
      %512 = vmatpush.bf16.msra.mxu0 0
      %513 = vmatpush.bf16.msra.mxu0 0
      %514 = vmatpush.bf16.msra.mxu0 %v505
      %515 = vmatmul.bf16.gmra.mxu0 %v456
      %v516 = vpop.f32.mrf.mxu0
      %v517 = vadd.f32 0.0, %v516
      %v518 = vpop.f32.mrf.mxu0
      %v519 = vadd.f32 0.0, %v518
      %520 = vmatmul.bf16.gmra.mxu0 %v459
      %v521 = vpop.f32.mrf.mxu0
      %v522 = vadd.f32 0.0, %v521
      %v523 = vpop.f32.mrf.mxu0
      %v524 = vadd.f32 0.0, %v523
      %525 = vmatmul.bf16.gmra.mxu0 %v462
      %v526 = vpop.f32.mrf.mxu0
      %v527 = vadd.f32 0.0, %v526
      %v528 = vpop.f32.mrf.mxu0
      %v529 = vadd.f32 0.0, %v528
      %530 = vmatmul.bf16.gmra.mxu0 %v465
      %v531 = vpop.f32.mrf.mxu0
      %v532 = vadd.f32 0.0, %v531
      %v533 = vpop.f32.mrf.mxu0
      %v534 = vadd.f32 0.0, %v533
      %535 = vmatmul.bf16.gmra.mxu0 %v468
      %v536 = vpop.f32.mrf.mxu0
      %v537 = vadd.f32 0.0, %v536
      %v538 = vpop.f32.mrf.mxu0
      %v539 = vadd.f32 0.0, %v538
      %540 = vmatmul.bf16.gmra.mxu0 %v471
      %v541 = vpop.f32.mrf.mxu0
      %v542 = vadd.f32 0.0, %v541
      %v543 = vpop.f32.mrf.mxu0
      %v544 = vadd.f32 0.0, %v543
      %545 = vmatmul.bf16.gmra.mxu0 %v474
      %v546 = vpop.f32.mrf.mxu0
      %v547 = vadd.f32 0.0, %v546
      %v548 = vpop.f32.mrf.mxu0
      %v549 = vadd.f32 0.0, %v548
      %550 = vmatmul.bf16.gmra.mxu0 %v477
      %v551 = vpop.f32.mrf.mxu0
      %v552 = vadd.f32 0.0, %v551
      %v553 = vpop.f32.mrf.mxu0
      %v554 = vadd.f32 0.0, %v553
      %555 = vmatmul.bf16.gmra.mxu0 %v480
      %v556 = vpop.f32.mrf.mxu0
      %v557 = vadd.f32 0.0, %v556
      %v558 = vpop.f32.mrf.mxu0
      %v559 = vadd.f32 0.0, %v558
      %560 = vmatmul.bf16.gmra.mxu0 %v483
      %v561 = vpop.f32.mrf.mxu0
      %v562 = vadd.f32 0.0, %v561
      %v563 = vpop.f32.mrf.mxu0
      %v564 = vadd.f32 0.0, %v563
      %565 = vmatmul.bf16.gmra.mxu0 %v486
      %v566 = vpop.f32.mrf.mxu0
      %v567 = vadd.f32 0.0, %v566
      %v568 = vpop.f32.mrf.mxu0
      %v569 = vadd.f32 0.0, %v568
      %570 = vmatmul.bf16.gmra.mxu0 %v489
      %v571 = vpop.f32.mrf.mxu0
      %v572 = vadd.f32 0.0, %v571
      %v573 = vpop.f32.mrf.mxu0
      %v574 = vadd.f32 0.0, %v573
      %575 = vmatmul.bf16.gmra.mxu0 %v492
      %v576 = vpop.f32.mrf.mxu0
      %v577 = vadd.f32 0.0, %v576
      %v578 = vpop.f32.mrf.mxu0
      %v579 = vadd.f32 0.0, %v578
      %580 = vmatmul.bf16.gmra.mxu0 %v495
      %v581 = vpop.f32.mrf.mxu0
      %v582 = vadd.f32 0.0, %v581
      %v583 = vpop.f32.mrf.mxu0
      %v584 = vadd.f32 0.0, %v583
      %585 = vmatmul.bf16.gmra.mxu0 %v498
      %v586 = vpop.f32.mrf.mxu0
      %v587 = vadd.f32 0.0, %v586
      %v588 = vpop.f32.mrf.mxu0
      %v589 = vadd.f32 0.0, %v588
      %590 = vmatmul.bf16.gmra.mxu0 %v501
      %v591 = vpop.f32.mrf.mxu0
      %v592 = vadd.f32 0.0, %v591
      %v593 = vpop.f32.mrf.mxu0
      %v594 = vadd.f32 0.0, %v593
      %595 = vdwg.mxu0
      %v628 = vunpack.c.l.b16 %v337
      %v629 = vunpack.c.l.b16 %v338
      %v630 = vunpack.c.l.b16 %v339
      %v631 = vunpack.c.l.b16 %v340
      %v632 = vunpack.c.l.b16 %v341
      %v633 = vunpack.c.l.b16 %v342
      %v634 = vunpack.c.l.b16 %v343
      %v635 = vunpack.c.l.b16 %v344
      %v636 = vunpack.c.l.b16 %v345
      %v637 = vunpack.c.l.b16 %v346
      %v638 = vunpack.c.l.b16 %v347
      %v639 = vunpack.c.l.b16 %v348
      %v640 = vunpack.c.l.b16 %v349
      %v641 = vunpack.c.l.b16 %v350
      %v642 = vunpack.c.l.b16 %v351
      %v643 = vunpack.c.l.b16 %v352
      %v644 = vunpack.c.l.b16 %v353
      %v645 = vunpack.c.l.b16 %v354
      %v646 = vunpack.c.l.b16 %v355
      %v647 = vunpack.c.l.b16 %v356
      %v648 = vunpack.c.l.b16 %v357
      %v649 = vunpack.c.l.b16 %v358
      %v650 = vunpack.c.l.b16 %v359
      %v651 = vunpack.c.l.b16 %v360
      %v652 = vunpack.c.l.b16 %v361
      %v653 = vunpack.c.l.b16 %v362
      %v654 = vunpack.c.l.b16 %v363
      %v655 = vunpack.c.l.b16 %v364
      %v656 = vunpack.c.l.b16 %v365
      %v657 = vunpack.c.l.b16 %v366
      %v658 = vunpack.c.l.b16 %v367
      %v659 = vunpack.c.l.b16 %v368
      %v660 = vpack.c.b16 %v629, %v628
      %v661 = vpack.c.b16 %v631, %v630
      %v662 = vpack.c.b16 %v633, %v632
      %v663 = vpack.c.b16 %v635, %v634
      %v664 = vpack.c.b16 %v637, %v636
      %v665 = vpack.c.b16 %v639, %v638
      %v666 = vpack.c.b16 %v641, %v640
      %v667 = vpack.c.b16 %v643, %v642
      %v668 = vpack.c.b16 %v645, %v644
      %v669 = vpack.c.b16 %v647, %v646
      %v670 = vpack.c.b16 %v649, %v648
      %v671 = vpack.c.b16 %v651, %v650
      %v672 = vpack.c.b16 %v653, %v652
      %v673 = vpack.c.b16 %v655, %v654
      %v674 = vpack.c.b16 %v657, %v656
      %v675 = vpack.c.b16 %v659, %v658
      %v680 = vunpack.c.l.b16 %v369
      %v681 = vunpack.c.l.b16 %v370
      %v682 = vunpack.c.l.b16 %v371
      %v683 = vunpack.c.l.b16 %v372
      %v684 = vpack.c.b16 %v681, %v680
      %v685 = vpack.c.b16 %v683, %v682
      %vm688 = vcmask 261120
      %v690 = vsel %vm688, %v660, 0
      %v693 = vsel %vm688, %v661, 0
      %v696 = vsel %vm688, %v662, 0
      %v699 = vsel %vm688, %v663, 0
      %v702 = vsel %vm688, %v664, 0
      %v705 = vsel %vm688, %v665, 0
      %v708 = vsel %vm688, %v666, 0
      %v711 = vsel %vm688, %v667, 0
      %v714 = vsel %vm688, %v668, 0
      %v717 = vsel %vm688, %v669, 0
      %v720 = vsel %vm688, %v670, 0
      %v723 = vsel %vm688, %v671, 0
      %v726 = vsel %vm688, %v672, 0
      %v729 = vsel %vm688, %v673, 0
      %v732 = vsel %vm688, %v674, 0
      %v735 = vsel %vm688, %v675, 0
      %737 = vmatpush.bf16.msra.mxu0 0
      %738 = vmatpush.bf16.msra.mxu0 0
      %739 = vmatpush.bf16.msra.mxu0 0
      %740 = vmatpush.bf16.msra.mxu0 0
      %741 = vmatpush.bf16.msra.mxu0 0
      %742 = vmatpush.bf16.msra.mxu0 0
      %743 = vmatpush.bf16.msra.mxu0 %v685
      %744 = vmatpush.bf16.msra.mxu0 %v684
      %745 = vmatmul.bf16.gmra.mxu0 %v690
      %v746 = vpop.f32.mrf.mxu0
      %v747 = vadd.f32 %v517, %v746
      %v748 = vpop.f32.mrf.mxu0
      %v749 = vadd.f32 %v519, %v748
      %750 = vmatmul.bf16.gmra.mxu0 %v693
      %v751 = vpop.f32.mrf.mxu0
      %v752 = vadd.f32 %v522, %v751
      %v753 = vpop.f32.mrf.mxu0
      %v754 = vadd.f32 %v524, %v753
      %755 = vmatmul.bf16.gmra.mxu0 %v696
      %v756 = vpop.f32.mrf.mxu0
      %v757 = vadd.f32 %v527, %v756
      %v758 = vpop.f32.mrf.mxu0
      %v759 = vadd.f32 %v529, %v758
      %760 = vmatmul.bf16.gmra.mxu0 %v699
      %v761 = vpop.f32.mrf.mxu0
      %v762 = vadd.f32 %v532, %v761
      %v763 = vpop.f32.mrf.mxu0
      %v764 = vadd.f32 %v534, %v763
      %765 = vmatmul.bf16.gmra.mxu0 %v702
      %v766 = vpop.f32.mrf.mxu0
      %v767 = vadd.f32 %v537, %v766
      %v768 = vpop.f32.mrf.mxu0
      %v769 = vadd.f32 %v539, %v768
      %770 = vmatmul.bf16.gmra.mxu0 %v705
      %v771 = vpop.f32.mrf.mxu0
      %v772 = vadd.f32 %v542, %v771
      %v773 = vpop.f32.mrf.mxu0
      %v774 = vadd.f32 %v544, %v773
      %775 = vmatmul.bf16.gmra.mxu0 %v708
      %v776 = vpop.f32.mrf.mxu0
      %v777 = vadd.f32 %v547, %v776
      %v778 = vpop.f32.mrf.mxu0
      %v779 = vadd.f32 %v549, %v778
      %780 = vmatmul.bf16.gmra.mxu0 %v711
      %v781 = vpop.f32.mrf.mxu0
      %v782 = vadd.f32 %v552, %v781
      %v783 = vpop.f32.mrf.mxu0
      %v784 = vadd.f32 %v554, %v783
      %785 = vmatmul.bf16.gmra.mxu0 %v714
      %v786 = vpop.f32.mrf.mxu0
      %v787 = vadd.f32 %v557, %v786
      %v788 = vpop.f32.mrf.mxu0
      %v789 = vadd.f32 %v559, %v788
      %790 = vmatmul.bf16.gmra.mxu0 %v717
      %v791 = vpop.f32.mrf.mxu0
      %v792 = vadd.f32 %v562, %v791
      %v793 = vpop.f32.mrf.mxu0
      %v794 = vadd.f32 %v564, %v793
      %795 = vmatmul.bf16.gmra.mxu0 %v720
      %v796 = vpop.f32.mrf.mxu0
      %v797 = vadd.f32 %v567, %v796
      %v798 = vpop.f32.mrf.mxu0
      %v799 = vadd.f32 %v569, %v798
      %800 = vmatmul.bf16.gmra.mxu0 %v723
      %v801 = vpop.f32.mrf.mxu0
      %v802 = vadd.f32 %v572, %v801
      %v803 = vpop.f32.mrf.mxu0
      %v804 = vadd.f32 %v574, %v803
      %805 = vmatmul.bf16.gmra.mxu0 %v726
      %v806 = vpop.f32.mrf.mxu0
      %v807 = vadd.f32 %v577, %v806
      %v808 = vpop.f32.mrf.mxu0
      %v809 = vadd.f32 %v579, %v808
      %810 = vmatmul.bf16.gmra.mxu0 %v729
      %v811 = vpop.f32.mrf.mxu0
      %v812 = vadd.f32 %v582, %v811
      %v813 = vpop.f32.mrf.mxu0
      %v814 = vadd.f32 %v584, %v813
      %815 = vmatmul.bf16.gmra.mxu0 %v732
      %v816 = vpop.f32.mrf.mxu0
      %v817 = vadd.f32 %v587, %v816
      %v818 = vpop.f32.mrf.mxu0
      %v819 = vadd.f32 %v589, %v818
      %820 = vmatmul.bf16.gmra.mxu0 %v735
      %v821 = vpop.f32.mrf.mxu0
      %v822 = vadd.f32 %v592, %v821
      %v823 = vpop.f32.mrf.mxu0
      %v824 = vadd.f32 %v594, %v823
      %825 = vdwg.mxu0
      %v826 = vld [vmem:[%s6] sm:$0x1]
      %v827 = vperm.slane %v826, 0
      %v828 = vadd.f32 %v747, %v827
      %v829 = vadd.f32 %v749, %v827
      %v830 = vadd.f32 %v752, %v827
      %v831 = vadd.f32 %v754, %v827
      %v832 = vadd.f32 %v757, %v827
      %v833 = vadd.f32 %v759, %v827
      %v834 = vadd.f32 %v762, %v827
      %v835 = vadd.f32 %v764, %v827
      %v836 = vadd.f32 %v767, %v827
      %v837 = vadd.f32 %v769, %v827
      %v838 = vadd.f32 %v772, %v827
      %v839 = vadd.f32 %v774, %v827
      %v840 = vadd.f32 %v777, %v827
      %v841 = vadd.f32 %v779, %v827
      %v842 = vadd.f32 %v782, %v827
      %v843 = vadd.f32 %v784, %v827
      %v844 = vadd.f32 %v787, %v827
      %v845 = vadd.f32 %v789, %v827
      %v846 = vadd.f32 %v792, %v827
      %v847 = vadd.f32 %v794, %v827
      %v848 = vadd.f32 %v797, %v827
      %v849 = vadd.f32 %v799, %v827
      %v850 = vadd.f32 %v802, %v827
      %v851 = vadd.f32 %v804, %v827
      %v852 = vadd.f32 %v807, %v827
      %v853 = vadd.f32 %v809, %v827
      %v854 = vadd.f32 %v812, %v827
      %v855 = vadd.f32 %v814, %v827
      %v856 = vadd.f32 %v817, %v827
      %v857 = vadd.f32 %v819, %v827
      %v858 = vadd.f32 %v822, %v827
      %v859 = vadd.f32 %v824, %v827
      %v860 = vmax.f32 %v828, 0.0
      %v861 = vmax.f32 %v829, 0.0
      %v862 = vmax.f32 %v830, 0.0
      %v863 = vmax.f32 %v831, 0.0
      %v864 = vmax.f32 %v832, 0.0
      %v865 = vmax.f32 %v833, 0.0
      %v866 = vmax.f32 %v834, 0.0
      %v867 = vmax.f32 %v835, 0.0
      %v868 = vmax.f32 %v836, 0.0
      %v869 = vmax.f32 %v837, 0.0
      %v870 = vmax.f32 %v838, 0.0
      %v871 = vmax.f32 %v839, 0.0
      %v872 = vmax.f32 %v840, 0.0
      %v873 = vmax.f32 %v841, 0.0
      %v874 = vmax.f32 %v842, 0.0
      %v875 = vmax.f32 %v843, 0.0
      %v876 = vmax.f32 %v844, 0.0
      %v877 = vmax.f32 %v845, 0.0
      %v878 = vmax.f32 %v846, 0.0
      %v879 = vmax.f32 %v847, 0.0
      %v880 = vmax.f32 %v848, 0.0
      %v881 = vmax.f32 %v849, 0.0
      %v882 = vmax.f32 %v850, 0.0
      %v883 = vmax.f32 %v851, 0.0
      %v884 = vmax.f32 %v852, 0.0
      %v885 = vmax.f32 %v853, 0.0
      %v886 = vmax.f32 %v854, 0.0
      %v887 = vmax.f32 %v855, 0.0
      %v888 = vmax.f32 %v856, 0.0
      %v889 = vmax.f32 %v857, 0.0
      %v890 = vmax.f32 %v858, 0.0
      %v891 = vmax.f32 %v859, 0.0
      %v892 = vpack.c.bf16 %v861, %v860
      %v893 = vpack.c.bf16 %v863, %v862
      %v894 = vpack.c.bf16 %v865, %v864
      %v895 = vpack.c.bf16 %v867, %v866
      %v896 = vpack.c.bf16 %v869, %v868
      %v897 = vpack.c.bf16 %v871, %v870
      %v898 = vpack.c.bf16 %v873, %v872
      %v899 = vpack.c.bf16 %v875, %v874
      %v900 = vpack.c.bf16 %v877, %v876
      %v901 = vpack.c.bf16 %v879, %v878
      %v902 = vpack.c.bf16 %v881, %v880
      %v903 = vpack.c.bf16 %v883, %v882
      %v904 = vpack.c.bf16 %v885, %v884
      %v905 = vpack.c.bf16 %v887, %v886
      %v906 = vpack.c.bf16 %v889, %v888
      %v907 = vpack.c.bf16 %v891, %v890
      %v908 = vld [vmem:[%s4] sm:$0xf]
      %v909 = vld [vmem:[%s4 + $0x4] sm:$0xf]
      %v910 = vld [vmem:[%s4 + $0x8] sm:$0xf]
      %v911 = vld [vmem:[%s4 + $0xc] sm:$0xf]
      %v912 = vld [vmem:[%s4 + $0x10] sm:$0xf]
      %v913 = vld [vmem:[%s4 + $0x14] sm:$0xf]
      %v914 = vld [vmem:[%s4 + $0x18] sm:$0xf]
      %v915 = vld [vmem:[%s4 + $0x1c] sm:$0xf]
      %v916 = vld [vmem:[%s4 + $0x20] sm:$0xf]
      %v917 = vld [vmem:[%s4 + $0x24] sm:$0xf]
      %v918 = vld [vmem:[%s4 + $0x28] sm:$0xf]
      %v919 = vld [vmem:[%s4 + $0x2c] sm:$0xf]
      %v920 = vld [vmem:[%s4 + $0x30] sm:$0xf]
      %v921 = vld [vmem:[%s4 + $0x34] sm:$0xf]
      %v922 = vld [vmem:[%s4 + $0x38] sm:$0xf]
      %v923 = vld [vmem:[%s4 + $0x3c] sm:$0xf]
      %v924 = vld [vmem:[%s5] sm:$0xf]
      %v926 = vsel %vm503, %v924, 0
      %928 = vmatpush.bf16.msra.mxu0 0
      %929 = vmatpush.bf16.msra.mxu0 0
      %930 = vmatpush.bf16.msra.mxu0 0
      %931 = vmatpush.bf16.msra.mxu0 0
      %932 = vmatpush.bf16.msra.mxu0 0
      %933 = vmatpush.bf16.msra.mxu0 0
      %934 = vmatpush.bf16.msra.mxu0 0
      %935 = vmatpush.bf16.msra.mxu0 %v926
      %936 = vmatmul.bf16.gmra.mxu0 %v456
      %v937 = vpop.f32.mrf.mxu0
      %v938 = vadd.f32 0.0, %v937
      %v939 = vpop.f32.mrf.mxu0
      %v940 = vadd.f32 0.0, %v939
      %941 = vmatmul.bf16.gmra.mxu0 %v459
      %v942 = vpop.f32.mrf.mxu0
      %v943 = vadd.f32 0.0, %v942
      %v944 = vpop.f32.mrf.mxu0
      %v945 = vadd.f32 0.0, %v944
      %946 = vmatmul.bf16.gmra.mxu0 %v462
      %v947 = vpop.f32.mrf.mxu0
      %v948 = vadd.f32 0.0, %v947
      %v949 = vpop.f32.mrf.mxu0
      %v950 = vadd.f32 0.0, %v949
      %951 = vmatmul.bf16.gmra.mxu0 %v465
      %v952 = vpop.f32.mrf.mxu0
      %v953 = vadd.f32 0.0, %v952
      %v954 = vpop.f32.mrf.mxu0
      %v955 = vadd.f32 0.0, %v954
      %956 = vmatmul.bf16.gmra.mxu0 %v468
      %v957 = vpop.f32.mrf.mxu0
      %v958 = vadd.f32 0.0, %v957
      %v959 = vpop.f32.mrf.mxu0
      %v960 = vadd.f32 0.0, %v959
      %961 = vmatmul.bf16.gmra.mxu0 %v471
      %v962 = vpop.f32.mrf.mxu0
      %v963 = vadd.f32 0.0, %v962
      %v964 = vpop.f32.mrf.mxu0
      %v965 = vadd.f32 0.0, %v964
      %966 = vmatmul.bf16.gmra.mxu0 %v474
      %v967 = vpop.f32.mrf.mxu0
      %v968 = vadd.f32 0.0, %v967
      %v969 = vpop.f32.mrf.mxu0
      %v970 = vadd.f32 0.0, %v969
      %971 = vmatmul.bf16.gmra.mxu0 %v477
      %v972 = vpop.f32.mrf.mxu0
      %v973 = vadd.f32 0.0, %v972
      %v974 = vpop.f32.mrf.mxu0
      %v975 = vadd.f32 0.0, %v974
      %976 = vmatmul.bf16.gmra.mxu0 %v480
      %v977 = vpop.f32.mrf.mxu0
      %v978 = vadd.f32 0.0, %v977
      %v979 = vpop.f32.mrf.mxu0
      %v980 = vadd.f32 0.0, %v979
      %981 = vmatmul.bf16.gmra.mxu0 %v483
      %v982 = vpop.f32.mrf.mxu0
      %v983 = vadd.f32 0.0, %v982
      %v984 = vpop.f32.mrf.mxu0
      %v985 = vadd.f32 0.0, %v984
      %986 = vmatmul.bf16.gmra.mxu0 %v486
      %v987 = vpop.f32.mrf.mxu0
      %v988 = vadd.f32 0.0, %v987
      %v989 = vpop.f32.mrf.mxu0
      %v990 = vadd.f32 0.0, %v989
      %991 = vmatmul.bf16.gmra.mxu0 %v489
      %v992 = vpop.f32.mrf.mxu0
      %v993 = vadd.f32 0.0, %v992
      %v994 = vpop.f32.mrf.mxu0
      %v995 = vadd.f32 0.0, %v994
      %996 = vmatmul.bf16.gmra.mxu0 %v492
      %v997 = vpop.f32.mrf.mxu0
      %v998 = vadd.f32 0.0, %v997
      %v999 = vpop.f32.mrf.mxu0
      %v1000 = vadd.f32 0.0, %v999
      %1001 = vmatmul.bf16.gmra.mxu0 %v495
      %v1002 = vpop.f32.mrf.mxu0
      %v1003 = vadd.f32 0.0, %v1002
      %v1004 = vpop.f32.mrf.mxu0
      %v1005 = vadd.f32 0.0, %v1004
      %1006 = vmatmul.bf16.gmra.mxu0 %v498
      %v1007 = vpop.f32.mrf.mxu0
      %v1008 = vadd.f32 0.0, %v1007
      %v1009 = vpop.f32.mrf.mxu0
      %v1010 = vadd.f32 0.0, %v1009
      %1011 = vmatmul.bf16.gmra.mxu0 %v501
      %v1012 = vpop.f32.mrf.mxu0
      %v1013 = vadd.f32 0.0, %v1012
      %v1014 = vpop.f32.mrf.mxu0
      %v1015 = vadd.f32 0.0, %v1014
      %1016 = vdwg.mxu0
      %v1033 = vunpack.c.l.b16 %v908
      %v1034 = vunpack.c.l.b16 %v909
      %v1035 = vunpack.c.l.b16 %v910
      %v1036 = vunpack.c.l.b16 %v911
      %v1037 = vunpack.c.l.b16 %v912
      %v1038 = vunpack.c.l.b16 %v913
      %v1039 = vunpack.c.l.b16 %v914
      %v1040 = vunpack.c.l.b16 %v915
      %v1041 = vunpack.c.l.b16 %v916
      %v1042 = vunpack.c.l.b16 %v917
      %v1043 = vunpack.c.l.b16 %v918
      %v1044 = vunpack.c.l.b16 %v919
      %v1045 = vunpack.c.l.b16 %v920
      %v1046 = vunpack.c.l.b16 %v921
      %v1047 = vunpack.c.l.b16 %v922
      %v1048 = vunpack.c.l.b16 %v923
      %v1049 = vpack.c.b16 %v1034, %v1033
      %v1050 = vpack.c.b16 %v1036, %v1035
      %v1051 = vpack.c.b16 %v1038, %v1037
      %v1052 = vpack.c.b16 %v1040, %v1039
      %v1053 = vpack.c.b16 %v1042, %v1041
      %v1054 = vpack.c.b16 %v1044, %v1043
      %v1055 = vpack.c.b16 %v1046, %v1045
      %v1056 = vpack.c.b16 %v1048, %v1047
      %1065 = vmatpush.bf16.msra.mxu0 %v1056
      %1066 = vmatpush.bf16.msra.mxu0 %v1055
      %1067 = vmatpush.bf16.msra.mxu0 %v1054
      %1068 = vmatpush.bf16.msra.mxu0 %v1053
      %1069 = vmatpush.bf16.msra.mxu0 %v1052
      %1070 = vmatpush.bf16.msra.mxu0 %v1051
      %1071 = vmatpush.bf16.msra.mxu0 %v1050
      %1072 = vmatpush.bf16.msra.mxu0 %v1049
      %1073 = vmatmul.bf16.gmra.mxu0 %v892
      %v1074 = vpop.f32.mrf.mxu0
      %v1075 = vadd.f32 %v938, %v1074
      %v1076 = vpop.f32.mrf.mxu0
      %v1077 = vadd.f32 %v940, %v1076
      %1078 = vmatmul.bf16.gmra.mxu0 %v893
      %v1079 = vpop.f32.mrf.mxu0
      %v1080 = vadd.f32 %v943, %v1079
      %v1081 = vpop.f32.mrf.mxu0
      %v1082 = vadd.f32 %v945, %v1081
      %1083 = vmatmul.bf16.gmra.mxu0 %v894
      %v1084 = vpop.f32.mrf.mxu0
      %v1085 = vadd.f32 %v948, %v1084
      %v1086 = vpop.f32.mrf.mxu0
      %v1087 = vadd.f32 %v950, %v1086
      %1088 = vmatmul.bf16.gmra.mxu0 %v895
      %v1089 = vpop.f32.mrf.mxu0
      %v1090 = vadd.f32 %v953, %v1089
      %v1091 = vpop.f32.mrf.mxu0
      %v1092 = vadd.f32 %v955, %v1091
      %1093 = vmatmul.bf16.gmra.mxu0 %v896
      %v1094 = vpop.f32.mrf.mxu0
      %v1095 = vadd.f32 %v958, %v1094
      %v1096 = vpop.f32.mrf.mxu0
      %v1097 = vadd.f32 %v960, %v1096
      %1098 = vmatmul.bf16.gmra.mxu0 %v897
      %v1099 = vpop.f32.mrf.mxu0
      %v1100 = vadd.f32 %v963, %v1099
      %v1101 = vpop.f32.mrf.mxu0
      %v1102 = vadd.f32 %v965, %v1101
      %1103 = vmatmul.bf16.gmra.mxu0 %v898
      %v1104 = vpop.f32.mrf.mxu0
      %v1105 = vadd.f32 %v968, %v1104
      %v1106 = vpop.f32.mrf.mxu0
      %v1107 = vadd.f32 %v970, %v1106
      %1108 = vmatmul.bf16.gmra.mxu0 %v899
      %v1109 = vpop.f32.mrf.mxu0
      %v1110 = vadd.f32 %v973, %v1109
      %v1111 = vpop.f32.mrf.mxu0
      %v1112 = vadd.f32 %v975, %v1111
      %1113 = vmatmul.bf16.gmra.mxu0 %v900
      %v1114 = vpop.f32.mrf.mxu0
      %v1115 = vadd.f32 %v978, %v1114
      %v1116 = vpop.f32.mrf.mxu0
      %v1117 = vadd.f32 %v980, %v1116
      %1118 = vmatmul.bf16.gmra.mxu0 %v901
      %v1119 = vpop.f32.mrf.mxu0
      %v1120 = vadd.f32 %v983, %v1119
      %v1121 = vpop.f32.mrf.mxu0
      %v1122 = vadd.f32 %v985, %v1121
      %1123 = vmatmul.bf16.gmra.mxu0 %v902
      %v1124 = vpop.f32.mrf.mxu0
      %v1125 = vadd.f32 %v988, %v1124
      %v1126 = vpop.f32.mrf.mxu0
      %v1127 = vadd.f32 %v990, %v1126
      %1128 = vmatmul.bf16.gmra.mxu0 %v903
      %v1129 = vpop.f32.mrf.mxu0
      %v1130 = vadd.f32 %v993, %v1129
      %v1131 = vpop.f32.mrf.mxu0
      %v1132 = vadd.f32 %v995, %v1131
      %1133 = vmatmul.bf16.gmra.mxu0 %v904
      %v1134 = vpop.f32.mrf.mxu0
      %v1135 = vadd.f32 %v998, %v1134
      %v1136 = vpop.f32.mrf.mxu0
      %v1137 = vadd.f32 %v1000, %v1136
      %1138 = vmatmul.bf16.gmra.mxu0 %v905
      %v1139 = vpop.f32.mrf.mxu0
      %v1140 = vadd.f32 %v1003, %v1139
      %v1141 = vpop.f32.mrf.mxu0
      %v1142 = vadd.f32 %v1005, %v1141
      %1143 = vmatmul.bf16.gmra.mxu0 %v906
      %v1144 = vpop.f32.mrf.mxu0
      %v1145 = vadd.f32 %v1008, %v1144
      %v1146 = vpop.f32.mrf.mxu0
      %v1147 = vadd.f32 %v1010, %v1146
      %1148 = vmatmul.bf16.gmra.mxu0 %v907
      %v1149 = vpop.f32.mrf.mxu0
      %v1150 = vadd.f32 %v1013, %v1149
      %v1151 = vpop.f32.mrf.mxu0
      %v1152 = vadd.f32 %v1015, %v1151
      %1153 = vdwg.mxu0
      %v1154 = vld [vmem:[%s6 + $0x1] sm:$0x1]
      %v1155 = vperm.slane %v1154, 0
      %v1156 = vadd.f32 %v1075, %v1155
      %v1157 = vadd.f32 %v1077, %v1155
      %v1158 = vadd.f32 %v1080, %v1155
      %v1159 = vadd.f32 %v1082, %v1155
      %v1160 = vadd.f32 %v1085, %v1155
      %v1161 = vadd.f32 %v1087, %v1155
      %v1162 = vadd.f32 %v1090, %v1155
      %v1163 = vadd.f32 %v1092, %v1155
      %v1164 = vadd.f32 %v1095, %v1155
      %v1165 = vadd.f32 %v1097, %v1155
      %v1166 = vadd.f32 %v1100, %v1155
      %v1167 = vadd.f32 %v1102, %v1155
      %v1168 = vadd.f32 %v1105, %v1155
      %v1169 = vadd.f32 %v1107, %v1155
      %v1170 = vadd.f32 %v1110, %v1155
      %v1171 = vadd.f32 %v1112, %v1155
      %v1172 = vadd.f32 %v1115, %v1155
      %v1173 = vadd.f32 %v1117, %v1155
      %v1174 = vadd.f32 %v1120, %v1155
      %v1175 = vadd.f32 %v1122, %v1155
      %v1176 = vadd.f32 %v1125, %v1155
      %v1177 = vadd.f32 %v1127, %v1155
      %v1178 = vadd.f32 %v1130, %v1155
      %v1179 = vadd.f32 %v1132, %v1155
      %v1180 = vadd.f32 %v1135, %v1155
      %v1181 = vadd.f32 %v1137, %v1155
      %v1182 = vadd.f32 %v1140, %v1155
      %v1183 = vadd.f32 %v1142, %v1155
      %v1184 = vadd.f32 %v1145, %v1155
      %v1185 = vadd.f32 %v1147, %v1155
      %v1186 = vadd.f32 %v1150, %v1155
      %v1187 = vadd.f32 %v1152, %v1155
      %v1188 = vmax.f32 %v1156, 0.0
      %v1189 = vmax.f32 %v1157, 0.0
      %v1190 = vmax.f32 %v1158, 0.0
      %v1191 = vmax.f32 %v1159, 0.0
      %v1192 = vmax.f32 %v1160, 0.0
      %v1193 = vmax.f32 %v1161, 0.0
      %v1194 = vmax.f32 %v1162, 0.0
      %v1195 = vmax.f32 %v1163, 0.0
      %v1196 = vmax.f32 %v1164, 0.0
      %v1197 = vmax.f32 %v1165, 0.0
      %v1198 = vmax.f32 %v1166, 0.0
      %v1199 = vmax.f32 %v1167, 0.0
      %v1200 = vmax.f32 %v1168, 0.0
      %v1201 = vmax.f32 %v1169, 0.0
      %v1202 = vmax.f32 %v1170, 0.0
      %v1203 = vmax.f32 %v1171, 0.0
      %v1204 = vmax.f32 %v1172, 0.0
      %v1205 = vmax.f32 %v1173, 0.0
      %v1206 = vmax.f32 %v1174, 0.0
      %v1207 = vmax.f32 %v1175, 0.0
      %v1208 = vmax.f32 %v1176, 0.0
      %v1209 = vmax.f32 %v1177, 0.0
      %v1210 = vmax.f32 %v1178, 0.0
      %v1211 = vmax.f32 %v1179, 0.0
      %v1212 = vmax.f32 %v1180, 0.0
      %v1213 = vmax.f32 %v1181, 0.0
      %v1214 = vmax.f32 %v1182, 0.0
      %v1215 = vmax.f32 %v1183, 0.0
      %v1216 = vmax.f32 %v1184, 0.0
      %v1217 = vmax.f32 %v1185, 0.0
      %v1218 = vmax.f32 %v1186, 0.0
      %v1219 = vmax.f32 %v1187, 0.0
      %vm1220 = vcmask 130048
      %1221 = vst.msk [vmem:[%s302] sm:$0xff] %vm1220, %v1188
      %1222 = vst.msk [vmem:[%s302 + $0x8] sm:$0xff] %vm1220, %v1189
      %1223 = vst.msk [vmem:[%s302 + $0x10] sm:$0xff] %vm1220, %v1190
      %1224 = vst.msk [vmem:[%s302 + $0x18] sm:$0xff] %vm1220, %v1191
      %1225 = vst.msk [vmem:[%s302 + $0x20] sm:$0xff] %vm1220, %v1192
      %1226 = vst.msk [vmem:[%s302 + $0x28] sm:$0xff] %vm1220, %v1193
      %1227 = vst.msk [vmem:[%s302 + $0x30] sm:$0xff] %vm1220, %v1194
      %1228 = vst.msk [vmem:[%s302 + $0x38] sm:$0xff] %vm1220, %v1195
      %1229 = vst.msk [vmem:[%s302 + $0x40] sm:$0xff] %vm1220, %v1196
      %1230 = vst.msk [vmem:[%s302 + $0x48] sm:$0xff] %vm1220, %v1197
      %1231 = vst.msk [vmem:[%s302 + $0x50] sm:$0xff] %vm1220, %v1198
      %1232 = vst.msk [vmem:[%s302 + $0x58] sm:$0xff] %vm1220, %v1199
      %1233 = vst.msk [vmem:[%s302 + $0x60] sm:$0xff] %vm1220, %v1200
      %1234 = vst.msk [vmem:[%s302 + $0x68] sm:$0xff] %vm1220, %v1201
      %1235 = vst.msk [vmem:[%s302 + $0x70] sm:$0xff] %vm1220, %v1202
      %1236 = vst.msk [vmem:[%s302 + $0x78] sm:$0xff] %vm1220, %v1203
      %1237 = vst.msk [vmem:[%s302 + $0x80] sm:$0xff] %vm1220, %v1204
      %1238 = vst.msk [vmem:[%s302 + $0x88] sm:$0xff] %vm1220, %v1205
      %1239 = vst.msk [vmem:[%s302 + $0x90] sm:$0xff] %vm1220, %v1206
      %1240 = vst.msk [vmem:[%s302 + $0x98] sm:$0xff] %vm1220, %v1207
      %1241 = vst.msk [vmem:[%s302 + $0xa0] sm:$0xff] %vm1220, %v1208
      %1242 = vst.msk [vmem:[%s302 + $0xa8] sm:$0xff] %vm1220, %v1209
      %1243 = vst.msk [vmem:[%s302 + $0xb0] sm:$0xff] %vm1220, %v1210
      %1244 = vst.msk [vmem:[%s302 + $0xb8] sm:$0xff] %vm1220, %v1211
      %1245 = vst.msk [vmem:[%s302 + $0xc0] sm:$0xff] %vm1220, %v1212
      %1246 = vst.msk [vmem:[%s302 + $0xc8] sm:$0xff] %vm1220, %v1213
      %1247 = vst.msk [vmem:[%s302 + $0xd0] sm:$0xff] %vm1220, %v1214
      %1248 = vst.msk [vmem:[%s302 + $0xd8] sm:$0xff] %vm1220, %v1215
      %1249 = vst.msk [vmem:[%s302 + $0xe0] sm:$0xff] %vm1220, %v1216
      %1250 = vst.msk [vmem:[%s302 + $0xe8] sm:$0xff] %vm1220, %v1217
      %1251 = vst.msk [vmem:[%s302 + $0xf0] sm:$0xff] %vm1220, %v1218
      %1252 = vst.msk [vmem:[%s302 + $0xf8] sm:$0xff] %vm1220, %v1219
      %s1253 = smul.u32 32, %s18
      %p1254 = scmp.lt.s32.totalorder %s1253, 63
      %s1255 = scalar_select %p1254, %s1253, 63
      %s1256 = smul.addr %s1255, 8
      %s1257 = scalar_lea.vmem %s7, %s1256
      // Predicated region
      $region49: #{tpu_custom_call.1} parent=47 // pred_check
        %p1258 = pneg %p193
      $region50: #{tpu_custom_call.1} parent=47 // pred_check_branch
        %1260 = sbr.rel (%p1258) target = $region52
      $region51: #{tpu_custom_call.1} parent=47 // pred_region
        %s1261 = smul.u32 32, %s18
      $region52: #{tpu_custom_call.1} parent=47 // pred_fallthru
        _
    $region48: #{tpu_custom_call.1} parent=5 // pred_fallthru
      _
    %p1262 = scmp.le.s32.totalorder 2, %s13
    // Predicated region
    $region53: #{tpu_custom_call.1} parent=5 // pred_check
      %p1263 = pneg %p1262
    $region54: #{tpu_custom_call.1} parent=5 // pred_check_branch
      %1265 = sbr.rel (%p1263) target = $region56
    $region55: #{tpu_custom_call.1} parent=5 // pred_region
      %s1266 = ssub.s32 %s13, 2
      // Predicated region
      $region57: #{tpu_custom_call.1} parent=55 // pred_check
        %p1267 = pneg %p199
      $region58: #{tpu_custom_call.1} parent=55 // pred_check_branch
        %1269 = sbr.rel (%p1267) target = $region60
      $region59: #{tpu_custom_call.1} parent=55 // pred_region
        %s1270 = smul.u32 32, %s19
        %p1271 = scmp.lt.s32.totalorder %s1270, 63
        %s1272 = scalar_select %p1271, %s1270, 63
        %s1273 = smul.addr %s1272, 8
        %s1274 = scalar_lea.vmem %s7, %s1273
      $region60: #{tpu_custom_call.1} parent=55 // pred_fallthru
        _
    $region56: #{tpu_custom_call.1} parent=5 // pred_fallthru
      _
  $region6: #{tpu_custom_call.1} parent=0 // loop_footer
    %s17 = sadd.s32 1, %s13
  $region7: #{tpu_custom_call.1} parent=0 // loop_footer_branch
    %12 = sbr.rel target = $region3
  $region8: #{tpu_custom_call.1} parent=0 // loop_exit
    _

</llo_original>
